<compile_context>
chip_gen: v7x
topology: tpu7x:2x2x1
jax: 0.10.0
libtpu: 0.0.40
codegen_flags: <defaults>
</compile_context>

<pallas_src>
import functools

import jax
import jax.numpy as jnp
from jax import lax
from jax.experimental import pallas as pl
from jax.experimental.pallas import tpu as pltpu


# ----------------------------------------------------------------------------
# Fused kernel: qkv projection + per-(batch, head) attention + head concat
# ----------------------------------------------------------------------------
def _fused_mha_kernel(x_ref, w_ref, b_ref, o_ref, *,
                      bsz, seq, num_heads, head_dim, inv_scale):
    emb = num_heads * head_dim

    # Single projection over all B*N rows: (B*N, E) @ (E, 3E) + bias  -> MXU.
    qkv = jnp.dot(x_ref[...], w_ref[...],
                  preferred_element_type=jnp.float32) + b_ref[...]       # (B*N, 3E)

    # Columns are pre-permuted so q / k / v (heads contiguous) are plain slices.
    q = qkv[:, :emb]
    k = qkv[:, emb:2 * emb]
    v = qkv[:, 2 * emb:]

    for b in range(bsz):                                   # trace-time unroll (tiny B)
        r = slice(b * seq, (b + 1) * seq)                  # sublane-aligned row window
        head_outs = []
        for h in range(num_heads):                         # trace-time unroll (H=4)
            c = slice(h * head_dim, (h + 1) * head_dim)
            qh = q[r, c]                                   # (N, D)
            kh = k[r, c]
            vh = v[r, c]

            # scores = q . k^T / sqrt(emb_size): contract D axes, no transpose.
            s = lax.dot_general(
                qh, kh, (((1,), (1,)), ((), ())),
                preferred_element_type=jnp.float32) * inv_scale          # (N, N)

            # Numerically-stable softmax; divide goes to the EUP (approx reciprocal).
            s = s - jnp.max(s, axis=-1, keepdims=True)
            e = jnp.exp(s)
            p = e * pl.reciprocal(jnp.sum(e, axis=-1, keepdims=True), approx=True)

            head_outs.append(
                jnp.dot(p, vh, preferred_element_type=jnp.float32))      # (N, D)

        # 'b h n d -> b n (h d)' done in-kernel: lane-dense (N, E) store per batch.
        o_ref[r, :] = jnp.concatenate(head_outs, axis=-1).astype(o_ref.dtype)


def fused_mha(x, w_eff, b_eff, *, emb_size, num_heads):
    bsz, n, e = x.shape
    head_dim = emb_size // num_heads
    inv_scale = 1.0 / (emb_size ** 0.5)       # matches PyTorch: energy / sqrt(emb_size)

    kernel = functools.partial(
        _fused_mha_kernel, bsz=bsz, seq=n,
        num_heads=num_heads, head_dim=head_dim, inv_scale=inv_scale)

    out2d = pl.pallas_call(
        kernel,
        in_specs=[
            pl.BlockSpec(memory_space=pltpu.MemorySpace.VMEM),   # x  (B*N, E)
            pl.BlockSpec(memory_space=pltpu.MemorySpace.VMEM),   # W  (E, 3E)
            pl.BlockSpec(memory_space=pltpu.MemorySpace.VMEM),   # b  (1, 3E)
        ],
        out_specs=pl.BlockSpec(memory_space=pltpu.MemorySpace.VMEM),
        out_shape=jax.ShapeDtypeStruct((bsz * n, e), jnp.float32),
    )(x.reshape(bsz * n, e), w_eff, b_eff.reshape(1, 3 * e))

    return out2d.reshape(bsz, n, e)


# ----------------------------------------------------------------------------
# Full module forward
# ----------------------------------------------------------------------------
def _qkv_col_permutation(emb_size, num_heads):
    """Maps PyTorch '(h d qkv)' output columns to '[q|k|v] x (heads contiguous)'."""
    d = emb_size // num_heads
    qkv_i = jnp.arange(3)[:, None, None]
    h_i = jnp.arange(num_heads)[None, :, None]
    d_i = jnp.arange(d)[None, None, :]
    # old column index for new position (qkv, h, d):  3*(h*d + d_i) + qkv
    return (3 * (h_i * d + d_i) + qkv_i).reshape(-1)


def multi_head_attention(x, w_qkv, b_qkv, *, emb_size=92, num_heads=4):
    bsz, n, e = x.shape
    assert e == emb_size and emb_size % num_heads == 0

    # One-time (wrapper-side) permute + transpose so the kernel sees (E, 3E) with q/k/v
    # head-contiguous columns. In a real deployment this is folded into weight loading.
    perm = _qkv_col_permutation(emb_size, num_heads)
    w_eff = w_qkv[perm].T          # (E, 3E)
    b_eff = b_qkv[perm]            # (3E,)

    return fused_mha(x, w_eff, b_eff, emb_size=emb_size, num_heads=num_heads)


# ----------------------------------------------------------------------------
# Pure-JAX reference (mirrors the PyTorch forward, original weight layout)
# ----------------------------------------------------------------------------
def reference(x, w_qkv, b_qkv, emb_size=92, num_heads=4):
    bsz, n, e = x.shape
    d = emb_size // num_heads
    qkv = x @ w_qkv.T + b_qkv
    qkv = qkv.reshape(bsz, n, num_heads, d, 3)          # '(h d qkv)', qkv fastest
    qkv = jnp.transpose(qkv, (4, 0, 2, 1, 3))           # (3, B, H, N, D)
    q, k, v = qkv[0], qkv[1], qkv[2]
    energy = jnp.einsum('bhqd,bhkd->bhqk', q, k)
    att = jax.nn.softmax(energy / (emb_size ** 0.5), axis=-1)
    out = jnp.einsum('bhal,bhlv->bhav', att, v)
    return jnp.transpose(out, (0, 2, 1, 3)).reshape(bsz, n, num_heads * d)


if __name__ == "__main__":
    emb_size, num_heads = 92, 4
    batch, seq = 2, 8

    key = jax.random.PRNGKey(0)
    kx, kw, kb = jax.random.split(key, 3)

    x = jax.random.normal(kx, (batch, seq, emb_size), dtype=jnp.float32)
    # nn.Linear(emb_size, 3*emb_size): weight (3E, E), bias (3E,)
    w_qkv = jax.random.normal(kw, (3 * emb_size, emb_size), dtype=jnp.float32) * 0.05
    b_qkv = jax.random.normal(kb, (3 * emb_size,), dtype=jnp.float32) * 0.05

    out = multi_head_attention(x, w_qkv, b_qkv, emb_size=emb_size, num_heads=num_heads)
    out = jax.block_until_ready(out)

    ref = reference(x, w_qkv, b_qkv, emb_size, num_heads)
    assert out.shape == (batch, seq, emb_size)
    # tolerance slightly relaxed for the approx-reciprocal softmax normalization
    assert jnp.allclose(out, ref, atol=2e-3, rtol=2e-3), "mismatch vs reference"

    print("KERNEL_OK")
</pallas_src>

<mosaic_0001>
module attributes {stable_mosaic.version = 11 : i64} {
  func.func @_fused_mha_kernel(%arg0: memref<16x92xf32, #tpu.memory_space<vmem>>, %arg1: memref<92x276xf32, #tpu.memory_space<vmem>>, %arg2: memref<1x276xf32, #tpu.memory_space<vmem>>, %arg3: memref<16x92xf32, #tpu.memory_space<vmem>>) attributes {dimension_semantics = [], scalar_prefetch = 0 : i64, scratch_operands = 0 : i64, tpu.core_type = #tpu.core_type<tc>} {
    %c0 = arith.constant 0 : index
    %c0_0 = arith.constant 0 : index
    %0 = vector.load %arg0[%c0, %c0_0] : memref<16x92xf32, #tpu.memory_space<vmem>>, vector<16x92xf32>
    %c0_1 = arith.constant 0 : index
    %c0_2 = arith.constant 0 : index
    %1 = vector.load %arg1[%c0_1, %c0_2] : memref<92x276xf32, #tpu.memory_space<vmem>>, vector<92x276xf32>
    %cst = arith.constant dense<0.000000e+00> : vector<16x276xf32>
    %2 = tpu.matmul %0, %1, %cst {dimension_numbers = #tpu.dot_dimension_numbers<[1], [0], [0], [1], [0, 0, 1, 1], [], []>} : vector<16x92xf32>, vector<92x276xf32>, vector<16x276xf32> -> vector<16x276xf32>
    %c0_3 = arith.constant 0 : index
    %c0_4 = arith.constant 0 : index
    %3 = vector.load %arg2[%c0_3, %c0_4] : memref<1x276xf32, #tpu.memory_space<vmem>>, vector<1x276xf32>
    %4 = vector.broadcast %3 : vector<1x276xf32> to vector<16x276xf32>
    %5 = arith.addf %2, %4 : vector<16x276xf32>
    %6 = vector.extract_strided_slice %5 {offsets = [0, 0], sizes = [16, 92], strides = [1, 1]} : vector<16x276xf32> to vector<16x92xf32>
    %7 = vector.extract_strided_slice %5 {offsets = [0, 92], sizes = [16, 92], strides = [1, 1]} : vector<16x276xf32> to vector<16x92xf32>
    %8 = vector.extract_strided_slice %5 {offsets = [0, 184], sizes = [16, 92], strides = [1, 1]} : vector<16x276xf32> to vector<16x92xf32>
    %9 = vector.extract_strided_slice %6 {offsets = [0, 0], sizes = [8, 23], strides = [1, 1]} : vector<16x92xf32> to vector<8x23xf32>
    %10 = vector.extract_strided_slice %7 {offsets = [0, 0], sizes = [8, 23], strides = [1, 1]} : vector<16x92xf32> to vector<8x23xf32>
    %11 = vector.extract_strided_slice %8 {offsets = [0, 0], sizes = [8, 23], strides = [1, 1]} : vector<16x92xf32> to vector<8x23xf32>
    %cst_5 = arith.constant dense<0.000000e+00> : vector<8x8xf32>
    %12 = tpu.matmul %9, %10, %cst_5 {dimension_numbers = #tpu.dot_dimension_numbers<[1], [1], [0], [0], [0, 0, 1, 0], [], []>} : vector<8x23xf32>, vector<8x23xf32>, vector<8x8xf32> -> vector<8x8xf32>
    %cst_6 = arith.constant 0.104257204 : f32
    %13 = vector.broadcast %cst_6 : f32 to vector<8x8xf32>
    %14 = arith.mulf %12, %13 : vector<8x8xf32>
    %cst_7 = arith.constant dense<0xFF800000> : vector<8xf32>
    %15 = vector.multi_reduction <maximumf>, %14, %cst_7 [1] : vector<8x8xf32> to vector<8xf32>
    %16 = vector.shape_cast %15 : vector<8xf32> to vector<8x1xf32>
    %17 = vector.broadcast %16 : vector<8x1xf32> to vector<8x8xf32>
    %18 = arith.subf %14, %17 : vector<8x8xf32>
    %19 = math.exp %18 : vector<8x8xf32>
    %cst_8 = arith.constant dense<0.000000e+00> : vector<8xf32>
    %20 = vector.multi_reduction <add>, %19, %cst_8 [1] : vector<8x8xf32> to vector<8xf32>
    %21 = vector.shape_cast %20 : vector<8xf32> to vector<8x1xf32>
    %22 = tpu.reciprocal %21 {approx = true} : vector<8x1xf32> -> vector<8x1xf32>
    %23 = vector.broadcast %22 : vector<8x1xf32> to vector<8x8xf32>
    %24 = arith.mulf %19, %23 : vector<8x8xf32>
    %cst_9 = arith.constant dense<0.000000e+00> : vector<8x23xf32>
    %25 = tpu.matmul %24, %11, %cst_9 {dimension_numbers = #tpu.dot_dimension_numbers<[1], [0], [0], [1], [0, 0, 1, 1], [], []>} : vector<8x8xf32>, vector<8x23xf32>, vector<8x23xf32> -> vector<8x23xf32>
    %26 = vector.extract_strided_slice %6 {offsets = [0, 23], sizes = [8, 23], strides = [1, 1]} : vector<16x92xf32> to vector<8x23xf32>
    %27 = vector.extract_strided_slice %7 {offsets = [0, 23], sizes = [8, 23], strides = [1, 1]} : vector<16x92xf32> to vector<8x23xf32>
    %28 = vector.extract_strided_slice %8 {offsets = [0, 23], sizes = [8, 23], strides = [1, 1]} : vector<16x92xf32> to vector<8x23xf32>
    %cst_10 = arith.constant dense<0.000000e+00> : vector<8x8xf32>
    %29 = tpu.matmul %26, %27, %cst_10 {dimension_numbers = #tpu.dot_dimension_numbers<[1], [1], [0], [0], [0, 0, 1, 0], [], []>} : vector<8x23xf32>, vector<8x23xf32>, vector<8x8xf32> -> vector<8x8xf32>
    %cst_11 = arith.constant 0.104257204 : f32
    %30 = vector.broadcast %cst_11 : f32 to vector<8x8xf32>
    %31 = arith.mulf %29, %30 : vector<8x8xf32>
    %cst_12 = arith.constant dense<0xFF800000> : vector<8xf32>
    %32 = vector.multi_reduction <maximumf>, %31, %cst_12 [1] : vector<8x8xf32> to vector<8xf32>
    %33 = vector.shape_cast %32 : vector<8xf32> to vector<8x1xf32>
    %34 = vector.broadcast %33 : vector<8x1xf32> to vector<8x8xf32>
    %35 = arith.subf %31, %34 : vector<8x8xf32>
    %36 = math.exp %35 : vector<8x8xf32>
    %cst_13 = arith.constant dense<0.000000e+00> : vector<8xf32>
    %37 = vector.multi_reduction <add>, %36, %cst_13 [1] : vector<8x8xf32> to vector<8xf32>
    %38 = vector.shape_cast %37 : vector<8xf32> to vector<8x1xf32>
    %39 = tpu.reciprocal %38 {approx = true} : vector<8x1xf32> -> vector<8x1xf32>
    %40 = vector.broadcast %39 : vector<8x1xf32> to vector<8x8xf32>
    %41 = arith.mulf %36, %40 : vector<8x8xf32>
    %cst_14 = arith.constant dense<0.000000e+00> : vector<8x23xf32>
    %42 = tpu.matmul %41, %28, %cst_14 {dimension_numbers = #tpu.dot_dimension_numbers<[1], [0], [0], [1], [0, 0, 1, 1], [], []>} : vector<8x8xf32>, vector<8x23xf32>, vector<8x23xf32> -> vector<8x23xf32>
    %43 = vector.extract_strided_slice %6 {offsets = [0, 46], sizes = [8, 23], strides = [1, 1]} : vector<16x92xf32> to vector<8x23xf32>
    %44 = vector.extract_strided_slice %7 {offsets = [0, 46], sizes = [8, 23], strides = [1, 1]} : vector<16x92xf32> to vector<8x23xf32>
    %45 = vector.extract_strided_slice %8 {offsets = [0, 46], sizes = [8, 23], strides = [1, 1]} : vector<16x92xf32> to vector<8x23xf32>
    %cst_15 = arith.constant dense<0.000000e+00> : vector<8x8xf32>
    %46 = tpu.matmul %43, %44, %cst_15 {dimension_numbers = #tpu.dot_dimension_numbers<[1], [1], [0], [0], [0, 0, 1, 0], [], []>} : vector<8x23xf32>, vector<8x23xf32>, vector<8x8xf32> -> vector<8x8xf32>
    %cst_16 = arith.constant 0.104257204 : f32
    %47 = vector.broadcast %cst_16 : f32 to vector<8x8xf32>
    %48 = arith.mulf %46, %47 : vector<8x8xf32>
    %cst_17 = arith.constant dense<0xFF800000> : vector<8xf32>
    %49 = vector.multi_reduction <maximumf>, %48, %cst_17 [1] : vector<8x8xf32> to vector<8xf32>
    %50 = vector.shape_cast %49 : vector<8xf32> to vector<8x1xf32>
    %51 = vector.broadcast %50 : vector<8x1xf32> to vector<8x8xf32>
    %52 = arith.subf %48, %51 : vector<8x8xf32>
    %53 = math.exp %52 : vector<8x8xf32>
    %cst_18 = arith.constant dense<0.000000e+00> : vector<8xf32>
    %54 = vector.multi_reduction <add>, %53, %cst_18 [1] : vector<8x8xf32> to vector<8xf32>
    %55 = vector.shape_cast %54 : vector<8xf32> to vector<8x1xf32>
    %56 = tpu.reciprocal %55 {approx = true} : vector<8x1xf32> -> vector<8x1xf32>
    %57 = vector.broadcast %56 : vector<8x1xf32> to vector<8x8xf32>
    %58 = arith.mulf %53, %57 : vector<8x8xf32>
    %cst_19 = arith.constant dense<0.000000e+00> : vector<8x23xf32>
    %59 = tpu.matmul %58, %45, %cst_19 {dimension_numbers = #tpu.dot_dimension_numbers<[1], [0], [0], [1], [0, 0, 1, 1], [], []>} : vector<8x8xf32>, vector<8x23xf32>, vector<8x23xf32> -> vector<8x23xf32>
    %60 = vector.extract_strided_slice %6 {offsets = [0, 69], sizes = [8, 23], strides = [1, 1]} : vector<16x92xf32> to vector<8x23xf32>
    %61 = vector.extract_strided_slice %7 {offsets = [0, 69], sizes = [8, 23], strides = [1, 1]} : vector<16x92xf32> to vector<8x23xf32>
    %62 = vector.extract_strided_slice %8 {offsets = [0, 69], sizes = [8, 23], strides = [1, 1]} : vector<16x92xf32> to vector<8x23xf32>
    %cst_20 = arith.constant dense<0.000000e+00> : vector<8x8xf32>
    %63 = tpu.matmul %60, %61, %cst_20 {dimension_numbers = #tpu.dot_dimension_numbers<[1], [1], [0], [0], [0, 0, 1, 0], [], []>} : vector<8x23xf32>, vector<8x23xf32>, vector<8x8xf32> -> vector<8x8xf32>
    %cst_21 = arith.constant 0.104257204 : f32
    %64 = vector.broadcast %cst_21 : f32 to vector<8x8xf32>
    %65 = arith.mulf %63, %64 : vector<8x8xf32>
    %cst_22 = arith.constant dense<0xFF800000> : vector<8xf32>
    %66 = vector.multi_reduction <maximumf>, %65, %cst_22 [1] : vector<8x8xf32> to vector<8xf32>
    %67 = vector.shape_cast %66 : vector<8xf32> to vector<8x1xf32>
    %68 = vector.broadcast %67 : vector<8x1xf32> to vector<8x8xf32>
    %69 = arith.subf %65, %68 : vector<8x8xf32>
    %70 = math.exp %69 : vector<8x8xf32>
    %cst_23 = arith.constant dense<0.000000e+00> : vector<8xf32>
    %71 = vector.multi_reduction <add>, %70, %cst_23 [1] : vector<8x8xf32> to vector<8xf32>
    %72 = vector.shape_cast %71 : vector<8xf32> to vector<8x1xf32>
    %73 = tpu.reciprocal %72 {approx = true} : vector<8x1xf32> -> vector<8x1xf32>
    %74 = vector.broadcast %73 : vector<8x1xf32> to vector<8x8xf32>
    %75 = arith.mulf %70, %74 : vector<8x8xf32>
    %cst_24 = arith.constant dense<0.000000e+00> : vector<8x23xf32>
    %76 = tpu.matmul %75, %62, %cst_24 {dimension_numbers = #tpu.dot_dimension_numbers<[1], [0], [0], [1], [0, 0, 1, 1], [], []>} : vector<8x8xf32>, vector<8x23xf32>, vector<8x23xf32> -> vector<8x23xf32>
    %77 = tpu.concatenate %25, %42, %59, %76 in 1 : vector<8x23xf32>, vector<8x23xf32>, vector<8x23xf32>, vector<8x23xf32> -> vector<8x92xf32>
    %c0_25 = arith.constant 0 : index
    %c0_26 = arith.constant 0 : index
    %78 = vector.load %arg3[%c0_25, %c0_26] : memref<16x92xf32, #tpu.memory_space<vmem>>, vector<8x92xf32>
    tpu.vector_store %arg3[%c0_25, %c0_26], %77 {strides = array<i32>} : memref<16x92xf32, #tpu.memory_space<vmem>>, vector<8x92xf32>,
    %79 = vector.extract_strided_slice %6 {offsets = [8, 0], sizes = [8, 23], strides = [1, 1]} : vector<16x92xf32> to vector<8x23xf32>
    %80 = vector.extract_strided_slice %7 {offsets = [8, 0], sizes = [8, 23], strides = [1, 1]} : vector<16x92xf32> to vector<8x23xf32>
    %81 = vector.extract_strided_slice %8 {offsets = [8, 0], sizes = [8, 23], strides = [1, 1]} : vector<16x92xf32> to vector<8x23xf32>
    %cst_27 = arith.constant dense<0.000000e+00> : vector<8x8xf32>
    %82 = tpu.matmul %79, %80, %cst_27 {dimension_numbers = #tpu.dot_dimension_numbers<[1], [1], [0], [0], [0, 0, 1, 0], [], []>} : vector<8x23xf32>, vector<8x23xf32>, vector<8x8xf32> -> vector<8x8xf32>
    %cst_28 = arith.constant 0.104257204 : f32
    %83 = vector.broadcast %cst_28 : f32 to vector<8x8xf32>
    %84 = arith.mulf %82, %83 : vector<8x8xf32>
    %cst_29 = arith.constant dense<0xFF800000> : vector<8xf32>
    %85 = vector.multi_reduction <maximumf>, %84, %cst_29 [1] : vector<8x8xf32> to vector<8xf32>
    %86 = vector.shape_cast %85 : vector<8xf32> to vector<8x1xf32>
    %87 = vector.broadcast %86 : vector<8x1xf32> to vector<8x8xf32>
    %88 = arith.subf %84, %87 : vector<8x8xf32>
    %89 = math.exp %88 : vector<8x8xf32>
    %cst_30 = arith.constant dense<0.000000e+00> : vector<8xf32>
    %90 = vector.multi_reduction <add>, %89, %cst_30 [1] : vector<8x8xf32> to vector<8xf32>
    %91 = vector.shape_cast %90 : vector<8xf32> to vector<8x1xf32>
    %92 = tpu.reciprocal %91 {approx = true} : vector<8x1xf32> -> vector<8x1xf32>
    %93 = vector.broadcast %92 : vector<8x1xf32> to vector<8x8xf32>
    %94 = arith.mulf %89, %93 : vector<8x8xf32>
    %cst_31 = arith.constant dense<0.000000e+00> : vector<8x23xf32>
    %95 = tpu.matmul %94, %81, %cst_31 {dimension_numbers = #tpu.dot_dimension_numbers<[1], [0], [0], [1], [0, 0, 1, 1], [], []>} : vector<8x8xf32>, vector<8x23xf32>, vector<8x23xf32> -> vector<8x23xf32>
    %96 = vector.extract_strided_slice %6 {offsets = [8, 23], sizes = [8, 23], strides = [1, 1]} : vector<16x92xf32> to vector<8x23xf32>
    %97 = vector.extract_strided_slice %7 {offsets = [8, 23], sizes = [8, 23], strides = [1, 1]} : vector<16x92xf32> to vector<8x23xf32>
    %98 = vector.extract_strided_slice %8 {offsets = [8, 23], sizes = [8, 23], strides = [1, 1]} : vector<16x92xf32> to vector<8x23xf32>
    %cst_32 = arith.constant dense<0.000000e+00> : vector<8x8xf32>
    %99 = tpu.matmul %96, %97, %cst_32 {dimension_numbers = #tpu.dot_dimension_numbers<[1], [1], [0], [0], [0, 0, 1, 0], [], []>} : vector<8x23xf32>, vector<8x23xf32>, vector<8x8xf32> -> vector<8x8xf32>
    %cst_33 = arith.constant 0.104257204 : f32
    %100 = vector.broadcast %cst_33 : f32 to vector<8x8xf32>
    %101 = arith.mulf %99, %100 : vector<8x8xf32>
    %cst_34 = arith.constant dense<0xFF800000> : vector<8xf32>
    %102 = vector.multi_reduction <maximumf>, %101, %cst_34 [1] : vector<8x8xf32> to vector<8xf32>
    %103 = vector.shape_cast %102 : vector<8xf32> to vector<8x1xf32>
    %104 = vector.broadcast %103 : vector<8x1xf32> to vector<8x8xf32>
    %105 = arith.subf %101, %104 : vector<8x8xf32>
    %106 = math.exp %105 : vector<8x8xf32>
    %cst_35 = arith.constant dense<0.000000e+00> : vector<8xf32>
    %107 = vector.multi_reduction <add>, %106, %cst_35 [1] : vector<8x8xf32> to vector<8xf32>
    %108 = vector.shape_cast %107 : vector<8xf32> to vector<8x1xf32>
    %109 = tpu.reciprocal %108 {approx = true} : vector<8x1xf32> -> vector<8x1xf32>
    %110 = vector.broadcast %109 : vector<8x1xf32> to vector<8x8xf32>
    %111 = arith.mulf %106, %110 : vector<8x8xf32>
    %cst_36 = arith.constant dense<0.000000e+00> : vector<8x23xf32>
    %112 = tpu.matmul %111, %98, %cst_36 {dimension_numbers = #tpu.dot_dimension_numbers<[1], [0], [0], [1], [0, 0, 1, 1], [], []>} : vector<8x8xf32>, vector<8x23xf32>, vector<8x23xf32> -> vector<8x23xf32>
    %113 = vector.extract_strided_slice %6 {offsets = [8, 46], sizes = [8, 23], strides = [1, 1]} : vector<16x92xf32> to vector<8x23xf32>
    %114 = vector.extract_strided_slice %7 {offsets = [8, 46], sizes = [8, 23], strides = [1, 1]} : vector<16x92xf32> to vector<8x23xf32>
    %115 = vector.extract_strided_slice %8 {offsets = [8, 46], sizes = [8, 23], strides = [1, 1]} : vector<16x92xf32> to vector<8x23xf32>
    %cst_37 = arith.constant dense<0.000000e+00> : vector<8x8xf32>
    %116 = tpu.matmul %113, %114, %cst_37 {dimension_numbers = #tpu.dot_dimension_numbers<[1], [1], [0], [0], [0, 0, 1, 0], [], []>} : vector<8x23xf32>, vector<8x23xf32>, vector<8x8xf32> -> vector<8x8xf32>
    %cst_38 = arith.constant 0.104257204 : f32
    %117 = vector.broadcast %cst_38 : f32 to vector<8x8xf32>
    %118 = arith.mulf %116, %117 : vector<8x8xf32>
    %cst_39 = arith.constant dense<0xFF800000> : vector<8xf32>
    %119 = vector.multi_reduction <maximumf>, %118, %cst_39 [1] : vector<8x8xf32> to vector<8xf32>
    %120 = vector.shape_cast %119 : vector<8xf32> to vector<8x1xf32>
    %121 = vector.broadcast %120 : vector<8x1xf32> to vector<8x8xf32>
    %122 = arith.subf %118, %121 : vector<8x8xf32>
    %123 = math.exp %122 : vector<8x8xf32>
    %cst_40 = arith.constant dense<0.000000e+00> : vector<8xf32>
    %124 = vector.multi_reduction <add>, %123, %cst_40 [1] : vector<8x8xf32> to vector<8xf32>
    %125 = vector.shape_cast %124 : vector<8xf32> to vector<8x1xf32>
    %126 = tpu.reciprocal %125 {approx = true} : vector<8x1xf32> -> vector<8x1xf32>
    %127 = vector.broadcast %126 : vector<8x1xf32> to vector<8x8xf32>
    %128 = arith.mulf %123, %127 : vector<8x8xf32>
    %cst_41 = arith.constant dense<0.000000e+00> : vector<8x23xf32>
    %129 = tpu.matmul %128, %115, %cst_41 {dimension_numbers = #tpu.dot_dimension_numbers<[1], [0], [0], [1], [0, 0, 1, 1], [], []>} : vector<8x8xf32>, vector<8x23xf32>, vector<8x23xf32> -> vector<8x23xf32>
    %130 = vector.extract_strided_slice %6 {offsets = [8, 69], sizes = [8, 23], strides = [1, 1]} : vector<16x92xf32> to vector<8x23xf32>
    %131 = vector.extract_strided_slice %7 {offsets = [8, 69], sizes = [8, 23], strides = [1, 1]} : vector<16x92xf32> to vector<8x23xf32>
    %132 = vector.extract_strided_slice %8 {offsets = [8, 69], sizes = [8, 23], strides = [1, 1]} : vector<16x92xf32> to vector<8x23xf32>
    %cst_42 = arith.constant dense<0.000000e+00> : vector<8x8xf32>
    %133 = tpu.matmul %130, %131, %cst_42 {dimension_numbers = #tpu.dot_dimension_numbers<[1], [1], [0], [0], [0, 0, 1, 0], [], []>} : vector<8x23xf32>, vector<8x23xf32>, vector<8x8xf32> -> vector<8x8xf32>
    %cst_43 = arith.constant 0.104257204 : f32
    %134 = vector.broadcast %cst_43 : f32 to vector<8x8xf32>
    %135 = arith.mulf %133, %134 : vector<8x8xf32>
    %cst_44 = arith.constant dense<0xFF800000> : vector<8xf32>
    %136 = vector.multi_reduction <maximumf>, %135, %cst_44 [1] : vector<8x8xf32> to vector<8xf32>
    %137 = vector.shape_cast %136 : vector<8xf32> to vector<8x1xf32>
    %138 = vector.broadcast %137 : vector<8x1xf32> to vector<8x8xf32>
    %139 = arith.subf %135, %138 : vector<8x8xf32>
    %140 = math.exp %139 : vector<8x8xf32>
    %cst_45 = arith.constant dense<0.000000e+00> : vector<8xf32>
    %141 = vector.multi_reduction <add>, %140, %cst_45 [1] : vector<8x8xf32> to vector<8xf32>
    %142 = vector.shape_cast %141 : vector<8xf32> to vector<8x1xf32>
    %143 = tpu.reciprocal %142 {approx = true} : vector<8x1xf32> -> vector<8x1xf32>
    %144 = vector.broadcast %143 : vector<8x1xf32> to vector<8x8xf32>
    %145 = arith.mulf %140, %144 : vector<8x8xf32>
    %cst_46 = arith.constant dense<0.000000e+00> : vector<8x23xf32>
    %146 = tpu.matmul %145, %132, %cst_46 {dimension_numbers = #tpu.dot_dimension_numbers<[1], [0], [0], [1], [0, 0, 1, 1], [], []>} : vector<8x8xf32>, vector<8x23xf32>, vector<8x23xf32> -> vector<8x23xf32>
    %147 = tpu.concatenate %95, %112, %129, %146 in 1 : vector<8x23xf32>, vector<8x23xf32>, vector<8x23xf32>, vector<8x23xf32> -> vector<8x92xf32>
    %c8 = arith.constant 8 : index
    %c0_47 = arith.constant 0 : index
    %148 = vector.load %arg3[%c8, %c0_47] : memref<16x92xf32, #tpu.memory_space<vmem>>, vector<8x92xf32>
    tpu.vector_store %arg3[%c8, %c0_47], %147 {strides = array<i32>} : memref<16x92xf32, #tpu.memory_space<vmem>>, vector<8x92xf32>,
    return
  }
}

</mosaic_0001>

<llo_original>
// kernel: tpu_custom_call.1
$region0: #{tpu_custom_call.1}
  #allocation0 [shape = 'u32[]', space=smem, size = 0x4, offset = 0x4, fixed_abs, tag = 'smem constant byte address 0x4 - core index']
  #allocation1 [shape = 'u32[144,128]{1,0:T(1,128)}', space=vmem, size = 0x12000, scoped, tag = 'internal scratch']
  %s0 = inlined_call_operand.vmem [shape: f32[16,92], index: 0, kind: input, shape index: {}]
  %s1 = inlined_call_operand.vmem [shape: f32[92,276], index: 1, kind: input, shape index: {}]
  %s2 = inlined_call_operand.vmem [shape: f32[1,276], index: 2, kind: input, shape index: {}]
  %s3 = inlined_call_operand.hbm [shape: f32[16,92], index: 3, kind: output, shape index: {}]
  %s4 = sld [smem:[#allocation0]]
  $region22: #{tpu_custom_call.1} parent=0
    _
  %s6 = ssub.s32 1, %s4
  %s7 = scalar_select 0, %s6, %s4
  $region1: #{tpu_custom_call.1} parent=0
    #allocation2 [shape = 'u8[8192]{0}', space=vmem, size = 0x2000, scoped, tag = 'output window, operand 0, single buffered']
    #allocation3 [shape = 's32[1]{0}', space=sflag, size = 0x4, scoped, tag = 'scoped memory for tpu_custom_call.1']
    %8 = vsyncpa [#allocation3], 0
    // Predicated region
    $region2: #{tpu_custom_call.1} parent=1 // pred_check
      _
    $region3: #{tpu_custom_call.1} parent=1 // pred_check_branch
      %10 = sbr.rel (0) target = $region5
    $region4: #{tpu_custom_call.1} parent=1 // pred_region
      _
    $region5: #{tpu_custom_call.1} parent=1 // pred_fallthru
      _
    // Predicated region
    $region6: #{tpu_custom_call.1} parent=1 // pred_check
      _
    $region7: #{tpu_custom_call.1} parent=1 // pred_check_branch
      %12 = sbr.rel (0) target = $region9
    $region8: #{tpu_custom_call.1} parent=1 // pred_region
      _
    $region9: #{tpu_custom_call.1} parent=1 // pred_fallthru
      _
    // Predicated region
    $region10: #{tpu_custom_call.1} parent=1 // pred_check
      _
    $region11: #{tpu_custom_call.1} parent=1 // pred_check_branch
      %14 = sbr.rel (0) target = $region13
    $region12: #{tpu_custom_call.1} parent=1 // pred_region
      _
    $region13: #{tpu_custom_call.1} parent=1 // pred_fallthru
      _
    %v15 = vld [vmem:[%s0] sm:$0xff]
    %v16 = vld [vmem:[%s0 + $0x8] sm:$0xff]
    %v17 = vld [vmem:[%s1] sm:$0xff]
    %v18 = vld [vmem:[%s1 + $0x8] sm:$0xff]
    %v19 = vld [vmem:[%s1 + $0x10] sm:$0xff]
    %v20 = vld [vmem:[%s1 + $0x18] sm:$0xff]
    %v21 = vld [vmem:[%s1 + $0x20] sm:$0xff]
    %v22 = vld [vmem:[%s1 + $0x28] sm:$0xff]
    %v23 = vld [vmem:[%s1 + $0x30] sm:$0xff]
    %v24 = vld [vmem:[%s1 + $0x38] sm:$0xff]
    %v25 = vld [vmem:[%s1 + $0x40] sm:$0xff]
    %v26 = vld [vmem:[%s1 + $0x48] sm:$0xff]
    %v27 = vld [vmem:[%s1 + $0x50] sm:$0xff]
    %v28 = vld [vmem:[%s1 + $0x58] sm:$0xff]
    %v29 = vld [vmem:[%s1 + $0x60] sm:$0xff]
    %v30 = vld [vmem:[%s1 + $0x68] sm:$0xff]
    %v31 = vld [vmem:[%s1 + $0x70] sm:$0xff]
    %v32 = vld [vmem:[%s1 + $0x78] sm:$0xff]
    %v33 = vld [vmem:[%s1 + $0x80] sm:$0xff]
    %v34 = vld [vmem:[%s1 + $0x88] sm:$0xff]
    %v35 = vld [vmem:[%s1 + $0x90] sm:$0xff]
    %v36 = vld [vmem:[%s1 + $0x98] sm:$0xff]
    %v37 = vld [vmem:[%s1 + $0xa0] sm:$0xff]
    %v38 = vld [vmem:[%s1 + $0xa8] sm:$0xff]
    %v39 = vld [vmem:[%s1 + $0xb0] sm:$0xff]
    %v40 = vld [vmem:[%s1 + $0xb8] sm:$0xff]
    %v41 = vld [vmem:[%s1 + $0xc0] sm:$0xff]
    %v42 = vld [vmem:[%s1 + $0xc8] sm:$0xff]
    %v43 = vld [vmem:[%s1 + $0xd0] sm:$0xff]
    %v44 = vld [vmem:[%s1 + $0xd8] sm:$0xff]
    %v45 = vld [vmem:[%s1 + $0xe0] sm:$0xff]
    %v46 = vld [vmem:[%s1 + $0xe8] sm:$0xff]
    %v47 = vld [vmem:[%s1 + $0xf0] sm:$0xff]
    %v48 = vld [vmem:[%s1 + $0xf8] sm:$0xff]
    %v49 = vld [vmem:[%s1 + $0x100] sm:$0xff]
    %v50 = vld [vmem:[%s1 + $0x108] sm:$0xf]
    %v51 = vld [vmem:[%s1 + $0x110] sm:$0xf]
    %v52 = vld [vmem:[%s1 + $0x118] sm:$0xf]
    %v53 = vld [vmem:[%s2] sm:$0x7]
    %v55 = vlaneseq
    %v56 = vshrl.u32 %v55, 7
    %v57 = vsub.s32 0, %v56
    %v58 = vrot.slane %v53, %v57
    %v59 = vlaneseq
    %v60 = vshrl.u32 %v59, 7
    %v61 = vsub.s32 1, %v60
    %v62 = vrot.slane %v53, %v61
    %v63 = vlaneseq
    %v64 = vshrl.u32 %v63, 7
    %v65 = vsub.s32 2, %v64
    %v66 = vrot.slane %v53, %v65
    %vm70 = vcmask 752640
    %v72 = vsel %vm70, %v15, 0
    %v75 = vsel %vm70, %v16, 0
    %vm77 = vcmask 1043456
    %v79 = vsel %vm77, %v50, 0
    %v82 = vsel %vm77, %v51, 0
    %v85 = vsel %vm77, %v52, 0
    %87 = vmatprep.subr.mxu0 %v18
    %88 = vmatpush1.msra.mxu0 %v17
    %89 = vmatprep.subr.mxu0 %v21
    %90 = vmatpush1.msra.mxu0 %v20
    %91 = vmatprep.subr.mxu0 %v24
    %92 = vmatpush1.msra.mxu0 %v23
    %93 = vmatprep.subr.mxu0 %v27
    %94 = vmatpush1.msra.mxu0 %v26
    %95 = vmatprep.subr.mxu0 %v30
    %96 = vmatpush1.msra.mxu0 %v29
    %97 = vmatprep.subr.mxu0 %v33
    %98 = vmatpush1.msra.mxu0 %v32
    %99 = vmatprep.subr.mxu0 %v36
    %100 = vmatpush1.msra.mxu0 %v35
    %101 = vmatprep.subr.mxu0 %v39
    %102 = vmatpush1.msra.mxu0 %v38
    %103 = vmatprep.subr.mxu0 %v42
    %104 = vmatpush1.msra.mxu0 %v41
    %105 = vmatprep.subr.mxu0 %v45
    %106 = vmatpush1.msra.mxu0 %v44
    %107 = vmatprep.subr.mxu0 %v48
    %108 = vmatpush1.msra.mxu0 %v47
    %109 = vmatprep.subr.mxu0 %v82
    %110 = vmatpush1.msra.mxu0 %v79
    %111 = vmatprep.subr.mxu0 0.0
    %112 = vmatpush1.msra.mxu0 0.0
    %113 = vmatprep.subr.mxu0 0.0
    %114 = vmatpush1.msra.mxu0 0.0
    %115 = vmatprep.subr.mxu0 0.0
    %116 = vmatpush1.msra.mxu0 0.0
    %117 = vmatprep.subr.mxu0 0.0
    %118 = vmatpush1.msra.mxu0 0.0
    %119 = vmatprep.subr.mxu0 0.0
    %120 = vmatpush1.msra.mxu0 0.0
    %121 = vmatprep.subr.mxu0 0.0
    %122 = vmatpush1.msra.mxu0 0.0
    %123 = vmatprep.subr.mxu0 0.0
    %124 = vmatpush1.msra.mxu0 0.0
    %125 = vmatprep.subr.mxu0 0.0
    %126 = vmatpush1.msra.mxu0 0.0
    %127 = vmatprep.subr.mxu0 0.0
    %128 = vmatpush1.msra.mxu0 0.0
    %129 = vmatprep.subr.mxu0 0.0
    %130 = vmatpush1.msra.mxu0 0.0
    %131 = vmatprep.subr.mxu0 0.0
    %132 = vmatpush1.msra.mxu0 0.0
    %133 = vmatprep.subr.mxu0 0.0
    %134 = vmatpush1.msra.mxu0 0.0
    %135 = vmatprep.subr.mxu0 0.0
    %136 = vmatpush1.msra.mxu0 0.0
    %137 = vmatprep.subr.mxu0 0.0
    %138 = vmatpush1.msra.mxu0 0.0
    %139 = vmatprep.subr.mxu0 0.0
    %140 = vmatpush1.msra.mxu0 0.0
    %141 = vmatprep.subr.mxu0 0.0
    %142 = vmatpush1.msra.mxu0 0.0
    %143 = vmatprep.subr.mxu0 0.0
    %144 = vmatpush1.msra.mxu0 0.0
    %145 = vmatprep.subr.mxu0 0.0
    %146 = vmatpush1.msra.mxu0 0.0
    %147 = vmatprep.subr.mxu0 0.0
    %148 = vmatpush1.msra.mxu0 0.0
    %149 = vmatprep.subr.mxu0 0.0
    %150 = vmatpush1.msra.mxu0 0.0
    %151 = vmatprep.mubr.f32.mxu0 0.0
    %152 = vmatmul.mubr.f32.gmra.mrb[0].mxu0 %v72
    %v153 = vpop.f32.mrb[0].mxu0
    %v154 = vadd.f32 %v58, %v153
    %v155 = vpop.f32.mrb[0].mxu0
    %v156 = vadd.f32 %v62, %v155
    %157 = vmatprep.mubr.f32.mxu0 0.0
    %158 = vmatmul.mubr.f32.gmra.mrb[0].mxu0 %v75
    %v159 = vpop.f32.mrb[0].mxu0
    %v160 = vadd.f32 %v58, %v159
    %v161 = vpop.f32.mrb[0].mxu0
    %v162 = vadd.f32 %v62, %v161
    %163 = vdwg.mxu0
    %164 = vmatprep.subr.mxu0 0.0
    %165 = vmatpush1.msra.mxu0 %v19
    %166 = vmatprep.subr.mxu0 0.0
    %167 = vmatpush1.msra.mxu0 %v22
    %168 = vmatprep.subr.mxu0 0.0
    %169 = vmatpush1.msra.mxu0 %v25
    %170 = vmatprep.subr.mxu0 0.0
    %171 = vmatpush1.msra.mxu0 %v28
    %172 = vmatprep.subr.mxu0 0.0
    %173 = vmatpush1.msra.mxu0 %v31
    %174 = vmatprep.subr.mxu0 0.0
    %175 = vmatpush1.msra.mxu0 %v34
    %176 = vmatprep.subr.mxu0 0.0
    %177 = vmatpush1.msra.mxu0 %v37
    %178 = vmatprep.subr.mxu0 0.0
    %179 = vmatpush1.msra.mxu0 %v40
    %180 = vmatprep.subr.mxu0 0.0
    %181 = vmatpush1.msra.mxu0 %v43
    %182 = vmatprep.subr.mxu0 0.0
    %183 = vmatpush1.msra.mxu0 %v46
    %184 = vmatprep.subr.mxu0 0.0
    %185 = vmatpush1.msra.mxu0 %v49
    %186 = vmatprep.subr.mxu0 0.0
    %187 = vmatpush1.msra.mxu0 %v85
    %188 = vmatprep.subr.mxu0 0.0
    %189 = vmatpush1.msra.mxu0 0.0
    %190 = vmatprep.subr.mxu0 0.0
    %191 = vmatpush1.msra.mxu0 0.0
    %192 = vmatprep.subr.mxu0 0.0
    %193 = vmatpush1.msra.mxu0 0.0
    %194 = vmatprep.subr.mxu0 0.0
    %195 = vmatpush1.msra.mxu0 0.0
    %196 = vmatprep.subr.mxu0 0.0
    %197 = vmatpush1.msra.mxu0 0.0
    %198 = vmatprep.subr.mxu0 0.0
    %199 = vmatpush1.msra.mxu0 0.0
    %200 = vmatprep.subr.mxu0 0.0
    %201 = vmatpush1.msra.mxu0 0.0
    %202 = vmatprep.subr.mxu0 0.0
    %203 = vmatpush1.msra.mxu0 0.0
    %204 = vmatprep.subr.mxu0 0.0
    %205 = vmatpush1.msra.mxu0 0.0
    %206 = vmatprep.subr.mxu0 0.0
    %207 = vmatpush1.msra.mxu0 0.0
    %208 = vmatprep.subr.mxu0 0.0
    %209 = vmatpush1.msra.mxu0 0.0
    %210 = vmatprep.subr.mxu0 0.0
    %211 = vmatpush1.msra.mxu0 0.0
    %212 = vmatprep.subr.mxu0 0.0
    %213 = vmatpush1.msra.mxu0 0.0
    %214 = vmatprep.subr.mxu0 0.0
    %215 = vmatpush1.msra.mxu0 0.0
    %216 = vmatprep.subr.mxu0 0.0
    %217 = vmatpush1.msra.mxu0 0.0
    %218 = vmatprep.subr.mxu0 0.0
    %219 = vmatpush1.msra.mxu0 0.0
    %220 = vmatprep.subr.mxu0 0.0
    %221 = vmatpush1.msra.mxu0 0.0
    %222 = vmatprep.subr.mxu0 0.0
    %223 = vmatpush1.msra.mxu0 0.0
    %224 = vmatprep.subr.mxu0 0.0
    %225 = vmatpush1.msra.mxu0 0.0
    %226 = vmatprep.subr.mxu0 0.0
    %227 = vmatpush1.msra.mxu0 0.0
    %228 = vmatprep.mubr.f32.mxu0 0.0
    %229 = vmatmul.mubr.f32.gmra.mrb[0].mxu0 %v72
    %v230 = vpop.f32.mrb[0].mxu0
    %v231 = vadd.f32 %v66, %v230
    %v232 = vpop.f32.mrb[0].mxu0
    %233 = vmatprep.mubr.f32.mxu0 0.0
    %234 = vmatmul.mubr.f32.gmra.mrb[0].mxu0 %v75
    %v235 = vpop.f32.mrb[0].mxu0
    %v236 = vadd.f32 %v66, %v235
    %v237 = vpop.f32.mrb[0].mxu0
    %238 = vdwg.mxu0
    %240 = vrot.lane.b32.xlu0 %v154, 36
    %v241 = vpop.permute.xlu0 %240
    %vm242 = vcmask 187392
    %v243 = vsel %vm242, %v154, 0
    %v245 = vsel %vm242, %v241, 0
    %247 = vmatprep.subr.mxu0 0.0
    %248 = vmatpush1.xpose.msra.mxu0 %v245
    %249 = vmatprep.subr.mxu0 0.0
    %250 = vmatpush1.xpose.msra.mxu0 0.0
    %251 = vmatprep.subr.mxu0 0.0
    %252 = vmatpush1.xpose.msra.mxu0 0.0
    %253 = vmatprep.subr.mxu0 0.0
    %254 = vmatpush1.xpose.msra.mxu0 0.0
    %255 = vmatprep.subr.mxu0 0.0
    %256 = vmatpush1.xpose.msra.mxu0 0.0
    %257 = vmatprep.subr.mxu0 0.0
    %258 = vmatpush1.xpose.msra.mxu0 0.0
    %259 = vmatprep.subr.mxu0 0.0
    %260 = vmatpush1.xpose.msra.mxu0 0.0
    %261 = vmatprep.subr.mxu0 0.0
    %262 = vmatpush1.xpose.msra.mxu0 0.0
    %263 = vmatprep.subr.mxu0 0.0
    %264 = vmatpush1.xpose.msra.mxu0 0.0
    %265 = vmatprep.subr.mxu0 0.0
    %266 = vmatpush1.xpose.msra.mxu0 0.0
    %267 = vmatprep.subr.mxu0 0.0
    %268 = vmatpush1.xpose.msra.mxu0 0.0
    %269 = vmatprep.subr.mxu0 0.0
    %270 = vmatpush1.xpose.msra.mxu0 0.0
    %271 = vmatprep.subr.mxu0 0.0
    %272 = vmatpush1.xpose.msra.mxu0 0.0
    %273 = vmatprep.subr.mxu0 0.0
    %274 = vmatpush1.xpose.msra.mxu0 0.0
    %275 = vmatprep.subr.mxu0 0.0
    %276 = vmatpush1.xpose.msra.mxu0 0.0
    %277 = vmatprep.subr.mxu0 0.0
    %278 = vmatpush1.xpose.msra.mxu0 0.0
    %279 = vmatprep.subr.mxu0 0.0
    %280 = vmatpush1.xpose.msra.mxu0 0.0
    %281 = vmatprep.subr.mxu0 0.0
    %282 = vmatpush1.xpose.msra.mxu0 0.0
    %283 = vmatprep.subr.mxu0 0.0
    %284 = vmatpush1.xpose.msra.mxu0 0.0
    %285 = vmatprep.subr.mxu0 0.0
    %286 = vmatpush1.xpose.msra.mxu0 0.0
    %287 = vmatprep.subr.mxu0 0.0
    %288 = vmatpush1.xpose.msra.mxu0 0.0
    %289 = vmatprep.subr.mxu0 0.0
    %290 = vmatpush1.xpose.msra.mxu0 0.0
    %291 = vmatprep.subr.mxu0 0.0
    %292 = vmatpush1.xpose.msra.mxu0 0.0
    %293 = vmatprep.subr.mxu0 0.0
    %294 = vmatpush1.xpose.msra.mxu0 0.0
    %295 = vmatprep.subr.mxu0 0.0
    %296 = vmatpush1.xpose.msra.mxu0 0.0
    %297 = vmatprep.subr.mxu0 0.0
    %298 = vmatpush1.xpose.msra.mxu0 0.0
    %299 = vmatprep.subr.mxu0 0.0
    %300 = vmatpush1.xpose.msra.mxu0 0.0
    %301 = vmatprep.subr.mxu0 0.0
    %302 = vmatpush1.xpose.msra.mxu0 0.0
    %303 = vmatprep.subr.mxu0 0.0
    %304 = vmatpush1.xpose.msra.mxu0 0.0
    %305 = vmatprep.subr.mxu0 0.0
    %306 = vmatpush1.xpose.msra.mxu0 0.0
    %307 = vmatprep.subr.mxu0 0.0
    %308 = vmatpush1.xpose.msra.mxu0 0.0
    %309 = vmatprep.subr.mxu0 0.0
    %310 = vmatpush1.xpose.msra.mxu0 0.0
    %311 = vmatprep.mubr.f32.mxu0 0.0
    %312 = vmatmul.mubr.f32.gmra.mrb[0].mxu0 %v243
    %v313 = vpop.f32.mrb[0].mxu0
    %v314 = vadd.f32 0.0, %v313
    %v315 = vpop.f32.mrb[0].mxu0
    %316 = vdwg.mxu0
    %v317 = vmul.f32 %v314, 0.1042572
    %vm318 = vcmask 64512
    %v319 = vsel %vm318, %v317, -inf
    %320 = vmax.xlane.f32.xlu0 %v319
    %v321 = vpop.xlane.xlu0 %320
    %v322 = vsub.f32 %v317, %v321
    %v323 = vmul.f32 %v322, 1.442695
    %v324 = vpow.pop %v323
    %v325 = vsel %vm318, %v324, 0.0
    %326 = vadd.xlane.f32.xlu0 %v325
    %v327 = vpop.xlane.xlu0 %326
    %v328 = vrcp.pop %v327
    %v329 = vmul.f32 %v324, %v328
    %331 = vrot.lane.b32.xlu0 %v156, 72
    %v332 = vpop.permute.xlu0 %331
    %v335 = vsel %vm318, %v329, 0
    %337 = vmatprep.subr.mxu0 0.0
    %338 = vmatpush1.msra.mxu0 %v332
    %339 = vmatprep.subr.mxu0 0.0
    %340 = vmatpush1.msra.mxu0 0.0
    %341 = vmatprep.subr.mxu0 0.0
    %342 = vmatpush1.msra.mxu0 0.0
    %343 = vmatprep.subr.mxu0 0.0
    %344 = vmatpush1.msra.mxu0 0.0
    %345 = vmatprep.subr.mxu0 0.0
    %346 = vmatpush1.msra.mxu0 0.0
    %347 = vmatprep.subr.mxu0 0.0
    %348 = vmatpush1.msra.mxu0 0.0
    %349 = vmatprep.subr.mxu0 0.0
    %350 = vmatpush1.msra.mxu0 0.0
    %351 = vmatprep.subr.mxu0 0.0
    %352 = vmatpush1.msra.mxu0 0.0
    %353 = vmatprep.subr.mxu0 0.0
    %354 = vmatpush1.msra.mxu0 0.0
    %355 = vmatprep.subr.mxu0 0.0
    %356 = vmatpush1.msra.mxu0 0.0
    %357 = vmatprep.subr.mxu0 0.0
    %358 = vmatpush1.msra.mxu0 0.0
    %359 = vmatprep.subr.mxu0 0.0
    %360 = vmatpush1.msra.mxu0 0.0
    %361 = vmatprep.subr.mxu0 0.0
    %362 = vmatpush1.msra.mxu0 0.0
    %363 = vmatprep.subr.mxu0 0.0
    %364 = vmatpush1.msra.mxu0 0.0
    %365 = vmatprep.subr.mxu0 0.0
    %366 = vmatpush1.msra.mxu0 0.0
    %367 = vmatprep.subr.mxu0 0.0
    %368 = vmatpush1.msra.mxu0 0.0
    %369 = vmatprep.subr.mxu0 0.0
    %370 = vmatpush1.msra.mxu0 0.0
    %371 = vmatprep.subr.mxu0 0.0
    %372 = vmatpush1.msra.mxu0 0.0
    %373 = vmatprep.subr.mxu0 0.0
    %374 = vmatpush1.msra.mxu0 0.0
    %375 = vmatprep.subr.mxu0 0.0
    %376 = vmatpush1.msra.mxu0 0.0
    %377 = vmatprep.subr.mxu0 0.0
    %378 = vmatpush1.msra.mxu0 0.0
    %379 = vmatprep.subr.mxu0 0.0
    %380 = vmatpush1.msra.mxu0 0.0
    %381 = vmatprep.subr.mxu0 0.0
    %382 = vmatpush1.msra.mxu0 0.0
    %383 = vmatprep.subr.mxu0 0.0
    %384 = vmatpush1.msra.mxu0 0.0
    %385 = vmatprep.subr.mxu0 0.0
    %386 = vmatpush1.msra.mxu0 0.0
    %387 = vmatprep.subr.mxu0 0.0
    %388 = vmatpush1.msra.mxu0 0.0
    %389 = vmatprep.subr.mxu0 0.0
    %390 = vmatpush1.msra.mxu0 0.0
    %391 = vmatprep.subr.mxu0 0.0
    %392 = vmatpush1.msra.mxu0 0.0
    %393 = vmatprep.subr.mxu0 0.0
    %394 = vmatpush1.msra.mxu0 0.0
    %395 = vmatprep.subr.mxu0 0.0
    %396 = vmatpush1.msra.mxu0 0.0
    %397 = vmatprep.subr.mxu0 0.0
    %398 = vmatpush1.msra.mxu0 0.0
    %399 = vmatprep.subr.mxu0 0.0
    %400 = vmatpush1.msra.mxu0 0.0
    %401 = vmatprep.mubr.f32.mxu0 0.0
    %402 = vmatmul.mubr.f32.gmra.mrb[0].mxu0 %v335
    %v403 = vpop.f32.mrb[0].mxu0
    %v404 = vadd.f32 0.0, %v403
    %v405 = vpop.f32.mrb[0].mxu0
    %406 = vdwg.mxu0
    %407 = vrot.lane.b32.xlu0 %v154, 105
    %v408 = vpop.permute.xlu0 %407
    %409 = vrot.lane.b32.xlu0 %v154, 13
    %v410 = vpop.permute.xlu0 %409
    %411 = vrot.lane.b32.xlu0 %v156, 13
    %v412 = vpop.permute.xlu0 %411
    %vm413 = vcmask 105472
    %v414 = vsel %vm413, %v410, %v412
    %v415 = vsel %vm242, %v408, 0
    %v417 = vsel %vm242, %v414, 0
    %419 = vmatprep.subr.mxu0 0.0
    %420 = vmatpush1.xpose.msra.mxu0 %v417
    %421 = vmatprep.subr.mxu0 0.0
    %422 = vmatpush1.xpose.msra.mxu0 0.0
    %423 = vmatprep.subr.mxu0 0.0
    %424 = vmatpush1.xpose.msra.mxu0 0.0
    %425 = vmatprep.subr.mxu0 0.0
    %426 = vmatpush1.xpose.msra.mxu0 0.0
    %427 = vmatprep.subr.mxu0 0.0
    %428 = vmatpush1.xpose.msra.mxu0 0.0
    %429 = vmatprep.subr.mxu0 0.0
    %430 = vmatpush1.xpose.msra.mxu0 0.0
    %431 = vmatprep.subr.mxu0 0.0
    %432 = vmatpush1.xpose.msra.mxu0 0.0
    %433 = vmatprep.subr.mxu0 0.0
    %434 = vmatpush1.xpose.msra.mxu0 0.0
    %435 = vmatprep.subr.mxu0 0.0
    %436 = vmatpush1.xpose.msra.mxu0 0.0
    %437 = vmatprep.subr.mxu0 0.0
    %438 = vmatpush1.xpose.msra.mxu0 0.0
    %439 = vmatprep.subr.mxu0 0.0
    %440 = vmatpush1.xpose.msra.mxu0 0.0
    %441 = vmatprep.subr.mxu0 0.0
    %442 = vmatpush1.xpose.msra.mxu0 0.0
    %443 = vmatprep.subr.mxu0 0.0
    %444 = vmatpush1.xpose.msra.mxu0 0.0
    %445 = vmatprep.subr.mxu0 0.0
    %446 = vmatpush1.xpose.msra.mxu0 0.0
    %447 = vmatprep.subr.mxu0 0.0
    %448 = vmatpush1.xpose.msra.mxu0 0.0
    %449 = vmatprep.subr.mxu0 0.0
    %450 = vmatpush1.xpose.msra.mxu0 0.0
    %451 = vmatprep.subr.mxu0 0.0
    %452 = vmatpush1.xpose.msra.mxu0 0.0
    %453 = vmatprep.subr.mxu0 0.0
    %454 = vmatpush1.xpose.msra.mxu0 0.0
    %455 = vmatprep.subr.mxu0 0.0
    %456 = vmatpush1.xpose.msra.mxu0 0.0
    %457 = vmatprep.subr.mxu0 0.0
    %458 = vmatpush1.xpose.msra.mxu0 0.0
    %459 = vmatprep.subr.mxu0 0.0
    %460 = vmatpush1.xpose.msra.mxu0 0.0
    %461 = vmatprep.subr.mxu0 0.0
    %462 = vmatpush1.xpose.msra.mxu0 0.0
    %463 = vmatprep.subr.mxu0 0.0
    %464 = vmatpush1.xpose.msra.mxu0 0.0
    %465 = vmatprep.subr.mxu0 0.0
    %466 = vmatpush1.xpose.msra.mxu0 0.0
    %467 = vmatprep.subr.mxu0 0.0
    %468 = vmatpush1.xpose.msra.mxu0 0.0
    %469 = vmatprep.subr.mxu0 0.0
    %470 = vmatpush1.xpose.msra.mxu0 0.0
    %471 = vmatprep.subr.mxu0 0.0
    %472 = vmatpush1.xpose.msra.mxu0 0.0
    %473 = vmatprep.subr.mxu0 0.0
    %474 = vmatpush1.xpose.msra.mxu0 0.0
    %475 = vmatprep.subr.mxu0 0.0
    %476 = vmatpush1.xpose.msra.mxu0 0.0
    %477 = vmatprep.subr.mxu0 0.0
    %478 = vmatpush1.xpose.msra.mxu0 0.0
    %479 = vmatprep.subr.mxu0 0.0
    %480 = vmatpush1.xpose.msra.mxu0 0.0
    %481 = vmatprep.subr.mxu0 0.0
    %482 = vmatpush1.xpose.msra.mxu0 0.0
    %483 = vmatprep.mubr.f32.mxu0 0.0
    %484 = vmatmul.mubr.f32.gmra.mrb[0].mxu0 %v415
    %v485 = vpop.f32.mrb[0].mxu0
    %v486 = vadd.f32 0.0, %v485
    %v487 = vpop.f32.mrb[0].mxu0
    %488 = vdwg.mxu0
    %v489 = vmul.f32 %v486, 0.1042572
    %v490 = vsel %vm318, %v489, -inf
    %491 = vmax.xlane.f32.xlu0 %v490
    %v492 = vpop.xlane.xlu0 %491
    %v493 = vsub.f32 %v489, %v492
    %v494 = vmul.f32 %v493, 1.442695
    %v495 = vpow.pop %v494
    %v496 = vsel %vm318, %v495, 0.0
    %497 = vadd.xlane.f32.xlu0 %v496
    %v498 = vpop.xlane.xlu0 %497
    %v499 = vrcp.pop %v498
    %v500 = vmul.f32 %v495, %v499
    %501 = vrot.lane.b32.xlu0 %v156, 49
    %v502 = vpop.permute.xlu0 %501
    %v505 = vsel %vm318, %v500, 0
    %507 = vmatprep.subr.mxu0 0.0
    %508 = vmatpush1.msra.mxu0 %v502
    %509 = vmatprep.subr.mxu0 0.0
    %510 = vmatpush1.msra.mxu0 0.0
    %511 = vmatprep.subr.mxu0 0.0
    %512 = vmatpush1.msra.mxu0 0.0
    %513 = vmatprep.subr.mxu0 0.0
    %514 = vmatpush1.msra.mxu0 0.0
    %515 = vmatprep.subr.mxu0 0.0
    %516 = vmatpush1.msra.mxu0 0.0
    %517 = vmatprep.subr.mxu0 0.0
    %518 = vmatpush1.msra.mxu0 0.0
    %519 = vmatprep.subr.mxu0 0.0
    %520 = vmatpush1.msra.mxu0 0.0
    %521 = vmatprep.subr.mxu0 0.0
    %522 = vmatpush1.msra.mxu0 0.0
    %523 = vmatprep.subr.mxu0 0.0
    %524 = vmatpush1.msra.mxu0 0.0
    %525 = vmatprep.subr.mxu0 0.0
    %526 = vmatpush1.msra.mxu0 0.0
    %527 = vmatprep.subr.mxu0 0.0
    %528 = vmatpush1.msra.mxu0 0.0
    %529 = vmatprep.subr.mxu0 0.0
    %530 = vmatpush1.msra.mxu0 0.0
    %531 = vmatprep.subr.mxu0 0.0
    %532 = vmatpush1.msra.mxu0 0.0
    %533 = vmatprep.subr.mxu0 0.0
    %534 = vmatpush1.msra.mxu0 0.0
    %535 = vmatprep.subr.mxu0 0.0
    %536 = vmatpush1.msra.mxu0 0.0
    %537 = vmatprep.subr.mxu0 0.0
    %538 = vmatpush1.msra.mxu0 0.0
    %539 = vmatprep.subr.mxu0 0.0
    %540 = vmatpush1.msra.mxu0 0.0
    %541 = vmatprep.subr.mxu0 0.0
    %542 = vmatpush1.msra.mxu0 0.0
    %543 = vmatprep.subr.mxu0 0.0
    %544 = vmatpush1.msra.mxu0 0.0
    %545 = vmatprep.subr.mxu0 0.0
    %546 = vmatpush1.msra.mxu0 0.0
    %547 = vmatprep.subr.mxu0 0.0
    %548 = vmatpush1.msra.mxu0 0.0
    %549 = vmatprep.subr.mxu0 0.0
    %550 = vmatpush1.msra.mxu0 0.0
    %551 = vmatprep.subr.mxu0 0.0
    %552 = vmatpush1.msra.mxu0 0.0
    %553 = vmatprep.subr.mxu0 0.0
    %554 = vmatpush1.msra.mxu0 0.0
    %555 = vmatprep.subr.mxu0 0.0
    %556 = vmatpush1.msra.mxu0 0.0
    %557 = vmatprep.subr.mxu0 0.0
    %558 = vmatpush1.msra.mxu0 0.0
    %559 = vmatprep.subr.mxu0 0.0
    %560 = vmatpush1.msra.mxu0 0.0
    %561 = vmatprep.subr.mxu0 0.0
    %562 = vmatpush1.msra.mxu0 0.0
    %563 = vmatprep.subr.mxu0 0.0
    %564 = vmatpush1.msra.mxu0 0.0
    %565 = vmatprep.subr.mxu0 0.0
    %566 = vmatpush1.msra.mxu0 0.0
    %567 = vmatprep.subr.mxu0 0.0
    %568 = vmatpush1.msra.mxu0 0.0
    %569 = vmatprep.subr.mxu0 0.0
    %570 = vmatpush1.msra.mxu0 0.0
    %571 = vmatprep.mubr.f32.mxu0 0.0
    %572 = vmatmul.mubr.f32.gmra.mrb[0].mxu0 %v505
    %v573 = vpop.f32.mrb[0].mxu0
    %v574 = vadd.f32 0.0, %v573
    %v575 = vpop.f32.mrb[0].mxu0
    %576 = vdwg.mxu0
    %577 = vrot.lane.b32.xlu0 %v154, 82
    %v578 = vpop.permute.xlu0 %577
    %579 = vrot.lane.b32.xlu0 %v156, 118
    %v580 = vpop.permute.xlu0 %579
    %v581 = vsel %vm242, %v578, 0
    %v583 = vsel %vm242, %v580, 0
    %585 = vmatprep.subr.mxu0 0.0
    %586 = vmatpush1.xpose.msra.mxu0 %v583
    %587 = vmatprep.subr.mxu0 0.0
    %588 = vmatpush1.xpose.msra.mxu0 0.0
    %589 = vmatprep.subr.mxu0 0.0
    %590 = vmatpush1.xpose.msra.mxu0 0.0
    %591 = vmatprep.subr.mxu0 0.0
    %592 = vmatpush1.xpose.msra.mxu0 0.0
    %593 = vmatprep.subr.mxu0 0.0
    %594 = vmatpush1.xpose.msra.mxu0 0.0
    %595 = vmatprep.subr.mxu0 0.0
    %596 = vmatpush1.xpose.msra.mxu0 0.0
    %597 = vmatprep.subr.mxu0 0.0
    %598 = vmatpush1.xpose.msra.mxu0 0.0
    %599 = vmatprep.subr.mxu0 0.0
    %600 = vmatpush1.xpose.msra.mxu0 0.0
    %601 = vmatprep.subr.mxu0 0.0
    %602 = vmatpush1.xpose.msra.mxu0 0.0
    %603 = vmatprep.subr.mxu0 0.0
    %604 = vmatpush1.xpose.msra.mxu0 0.0
    %605 = vmatprep.subr.mxu0 0.0
    %606 = vmatpush1.xpose.msra.mxu0 0.0
    %607 = vmatprep.subr.mxu0 0.0
    %608 = vmatpush1.xpose.msra.mxu0 0.0
    %609 = vmatprep.subr.mxu0 0.0
    %610 = vmatpush1.xpose.msra.mxu0 0.0
    %611 = vmatprep.subr.mxu0 0.0
    %612 = vmatpush1.xpose.msra.mxu0 0.0
    %613 = vmatprep.subr.mxu0 0.0
    %614 = vmatpush1.xpose.msra.mxu0 0.0
    %615 = vmatprep.subr.mxu0 0.0
    %616 = vmatpush1.xpose.msra.mxu0 0.0
    %617 = vmatprep.subr.mxu0 0.0
    %618 = vmatpush1.xpose.msra.mxu0 0.0
    %619 = vmatprep.subr.mxu0 0.0
    %620 = vmatpush1.xpose.msra.mxu0 0.0
    %621 = vmatprep.subr.mxu0 0.0
    %622 = vmatpush1.xpose.msra.mxu0 0.0
    %623 = vmatprep.subr.mxu0 0.0
    %624 = vmatpush1.xpose.msra.mxu0 0.0
    %625 = vmatprep.subr.mxu0 0.0
    %626 = vmatpush1.xpose.msra.mxu0 0.0
    %627 = vmatprep.subr.mxu0 0.0
    %628 = vmatpush1.xpose.msra.mxu0 0.0
    %629 = vmatprep.subr.mxu0 0.0
    %630 = vmatpush1.xpose.msra.mxu0 0.0
    %631 = vmatprep.subr.mxu0 0.0
    %632 = vmatpush1.xpose.msra.mxu0 0.0
    %633 = vmatprep.subr.mxu0 0.0
    %634 = vmatpush1.xpose.msra.mxu0 0.0
    %635 = vmatprep.subr.mxu0 0.0
    %636 = vmatpush1.xpose.msra.mxu0 0.0
    %637 = vmatprep.subr.mxu0 0.0
    %638 = vmatpush1.xpose.msra.mxu0 0.0
    %639 = vmatprep.subr.mxu0 0.0
    %640 = vmatpush1.xpose.msra.mxu0 0.0
    %641 = vmatprep.subr.mxu0 0.0
    %642 = vmatpush1.xpose.msra.mxu0 0.0
    %643 = vmatprep.subr.mxu0 0.0
    %644 = vmatpush1.xpose.msra.mxu0 0.0
    %645 = vmatprep.subr.mxu0 0.0
    %646 = vmatpush1.xpose.msra.mxu0 0.0
    %647 = vmatprep.subr.mxu0 0.0
    %648 = vmatpush1.xpose.msra.mxu0 0.0
    %649 = vmatprep.mubr.f32.mxu0 0.0
    %650 = vmatmul.mubr.f32.gmra.mrb[0].mxu0 %v581
    %v651 = vpop.f32.mrb[0].mxu0
    %v652 = vadd.f32 0.0, %v651
    %v653 = vpop.f32.mrb[0].mxu0
    %654 = vdwg.mxu0
    %v655 = vmul.f32 %v652, 0.1042572
    %v656 = vsel %vm318, %v655, -inf
    %657 = vmax.xlane.f32.xlu0 %v656
    %v658 = vpop.xlane.xlu0 %657
    %v659 = vsub.f32 %v655, %v658
    %v660 = vmul.f32 %v659, 1.442695
    %v661 = vpow.pop %v660
    %v662 = vsel %vm318, %v661, 0.0
    %663 = vadd.xlane.f32.xlu0 %v662
    %v664 = vpop.xlane.xlu0 %663
    %v665 = vrcp.pop %v664
    %v666 = vmul.f32 %v661, %v665
    %667 = vrot.lane.b32.xlu0 %v156, 26
    %v668 = vpop.permute.xlu0 %667
    %v671 = vsel %vm318, %v666, 0
    %673 = vmatprep.subr.mxu0 0.0
    %674 = vmatpush1.msra.mxu0 %v668
    %675 = vmatprep.subr.mxu0 0.0
    %676 = vmatpush1.msra.mxu0 0.0
    %677 = vmatprep.subr.mxu0 0.0
    %678 = vmatpush1.msra.mxu0 0.0
    %679 = vmatprep.subr.mxu0 0.0
    %680 = vmatpush1.msra.mxu0 0.0
    %681 = vmatprep.subr.mxu0 0.0
    %682 = vmatpush1.msra.mxu0 0.0
    %683 = vmatprep.subr.mxu0 0.0
    %684 = vmatpush1.msra.mxu0 0.0
    %685 = vmatprep.subr.mxu0 0.0
    %686 = vmatpush1.msra.mxu0 0.0
    %687 = vmatprep.subr.mxu0 0.0
    %688 = vmatpush1.msra.mxu0 0.0
    %689 = vmatprep.subr.mxu0 0.0
    %690 = vmatpush1.msra.mxu0 0.0
    %691 = vmatprep.subr.mxu0 0.0
    %692 = vmatpush1.msra.mxu0 0.0
    %693 = vmatprep.subr.mxu0 0.0
    %694 = vmatpush1.msra.mxu0 0.0
    %695 = vmatprep.subr.mxu0 0.0
    %696 = vmatpush1.msra.mxu0 0.0
    %697 = vmatprep.subr.mxu0 0.0
    %698 = vmatpush1.msra.mxu0 0.0
    %699 = vmatprep.subr.mxu0 0.0
    %700 = vmatpush1.msra.mxu0 0.0
    %701 = vmatprep.subr.mxu0 0.0
    %702 = vmatpush1.msra.mxu0 0.0
    %703 = vmatprep.subr.mxu0 0.0
    %704 = vmatpush1.msra.mxu0 0.0
    %705 = vmatprep.subr.mxu0 0.0
    %706 = vmatpush1.msra.mxu0 0.0
    %707 = vmatprep.subr.mxu0 0.0
    %708 = vmatpush1.msra.mxu0 0.0
    %709 = vmatprep.subr.mxu0 0.0
    %710 = vmatpush1.msra.mxu0 0.0
    %711 = vmatprep.subr.mxu0 0.0
    %712 = vmatpush1.msra.mxu0 0.0
    %713 = vmatprep.subr.mxu0 0.0
    %714 = vmatpush1.msra.mxu0 0.0
    %715 = vmatprep.subr.mxu0 0.0
    %716 = vmatpush1.msra.mxu0 0.0
    %717 = vmatprep.subr.mxu0 0.0
    %718 = vmatpush1.msra.mxu0 0.0
    %719 = vmatprep.subr.mxu0 0.0
    %720 = vmatpush1.msra.mxu0 0.0
    %721 = vmatprep.subr.mxu0 0.0
    %722 = vmatpush1.msra.mxu0 0.0
    %723 = vmatprep.subr.mxu0 0.0
    %724 = vmatpush1.msra.mxu0 0.0
    %725 = vmatprep.subr.mxu0 0.0
    %726 = vmatpush1.msra.mxu0 0.0
    %727 = vmatprep.subr.mxu0 0.0
    %728 = vmatpush1.msra.mxu0 0.0
    %729 = vmatprep.subr.mxu0 0.0
    %730 = vmatpush1.msra.mxu0 0.0
    %731 = vmatprep.subr.mxu0 0.0
    %732 = vmatpush1.msra.mxu0 0.0
    %733 = vmatprep.subr.mxu0 0.0
    %734 = vmatpush1.msra.mxu0 0.0
    %735 = vmatprep.subr.mxu0 0.0
    %736 = vmatpush1.msra.mxu0 0.0
    %737 = vmatprep.mubr.f32.mxu0 0.0
    %738 = vmatmul.mubr.f32.gmra.mrb[0].mxu0 %v671
    %v739 = vpop.f32.mrb[0].mxu0
    %v740 = vadd.f32 0.0, %v739
    %v741 = vpop.f32.mrb[0].mxu0
    %742 = vdwg.mxu0
    %743 = vrot.lane.b32.xlu0 %v154, 59
    %v744 = vpop.permute.xlu0 %743
    %745 = vrot.lane.b32.xlu0 %v156, 95
    %v746 = vpop.permute.xlu0 %745
    %v747 = vsel %vm242, %v744, 0
    %v749 = vsel %vm242, %v746, 0
    %751 = vmatprep.subr.mxu0 0.0
    %752 = vmatpush1.xpose.msra.mxu0 %v749
    %753 = vmatprep.subr.mxu0 0.0
    %754 = vmatpush1.xpose.msra.mxu0 0.0
    %755 = vmatprep.subr.mxu0 0.0
    %756 = vmatpush1.xpose.msra.mxu0 0.0
    %757 = vmatprep.subr.mxu0 0.0
    %758 = vmatpush1.xpose.msra.mxu0 0.0
    %759 = vmatprep.subr.mxu0 0.0
    %760 = vmatpush1.xpose.msra.mxu0 0.0
    %761 = vmatprep.subr.mxu0 0.0
    %762 = vmatpush1.xpose.msra.mxu0 0.0
    %763 = vmatprep.subr.mxu0 0.0
    %764 = vmatpush1.xpose.msra.mxu0 0.0
    %765 = vmatprep.subr.mxu0 0.0
    %766 = vmatpush1.xpose.msra.mxu0 0.0
    %767 = vmatprep.subr.mxu0 0.0
    %768 = vmatpush1.xpose.msra.mxu0 0.0
    %769 = vmatprep.subr.mxu0 0.0
    %770 = vmatpush1.xpose.msra.mxu0 0.0
    %771 = vmatprep.subr.mxu0 0.0
    %772 = vmatpush1.xpose.msra.mxu0 0.0
    %773 = vmatprep.subr.mxu0 0.0
    %774 = vmatpush1.xpose.msra.mxu0 0.0
    %775 = vmatprep.subr.mxu0 0.0
    %776 = vmatpush1.xpose.msra.mxu0 0.0
    %777 = vmatprep.subr.mxu0 0.0
    %778 = vmatpush1.xpose.msra.mxu0 0.0
    %779 = vmatprep.subr.mxu0 0.0
    %780 = vmatpush1.xpose.msra.mxu0 0.0
    %781 = vmatprep.subr.mxu0 0.0
    %782 = vmatpush1.xpose.msra.mxu0 0.0
    %783 = vmatprep.subr.mxu0 0.0
    %784 = vmatpush1.xpose.msra.mxu0 0.0
    %785 = vmatprep.subr.mxu0 0.0
    %786 = vmatpush1.xpose.msra.mxu0 0.0
    %787 = vmatprep.subr.mxu0 0.0
    %788 = vmatpush1.xpose.msra.mxu0 0.0
    %789 = vmatprep.subr.mxu0 0.0
    %790 = vmatpush1.xpose.msra.mxu0 0.0
    %791 = vmatprep.subr.mxu0 0.0
    %792 = vmatpush1.xpose.msra.mxu0 0.0
    %793 = vmatprep.subr.mxu0 0.0
    %794 = vmatpush1.xpose.msra.mxu0 0.0
    %795 = vmatprep.subr.mxu0 0.0
    %796 = vmatpush1.xpose.msra.mxu0 0.0
    %797 = vmatprep.subr.mxu0 0.0
    %798 = vmatpush1.xpose.msra.mxu0 0.0
    %799 = vmatprep.subr.mxu0 0.0
    %800 = vmatpush1.xpose.msra.mxu0 0.0
    %801 = vmatprep.subr.mxu0 0.0
    %802 = vmatpush1.xpose.msra.mxu0 0.0
    %803 = vmatprep.subr.mxu0 0.0
    %804 = vmatpush1.xpose.msra.mxu0 0.0
    %805 = vmatprep.subr.mxu0 0.0
    %806 = vmatpush1.xpose.msra.mxu0 0.0
    %807 = vmatprep.subr.mxu0 0.0
    %808 = vmatpush1.xpose.msra.mxu0 0.0
    %809 = vmatprep.subr.mxu0 0.0
    %810 = vmatpush1.xpose.msra.mxu0 0.0
    %811 = vmatprep.subr.mxu0 0.0
    %812 = vmatpush1.xpose.msra.mxu0 0.0
    %813 = vmatprep.subr.mxu0 0.0
    %814 = vmatpush1.xpose.msra.mxu0 0.0
    %815 = vmatprep.mubr.f32.mxu0 0.0
    %816 = vmatmul.mubr.f32.gmra.mrb[0].mxu0 %v747
    %v817 = vpop.f32.mrb[0].mxu0
    %v818 = vadd.f32 0.0, %v817
    %v819 = vpop.f32.mrb[0].mxu0
    %820 = vdwg.mxu0
    %v821 = vmul.f32 %v818, 0.1042572
    %v822 = vsel %vm318, %v821, -inf
    %823 = vmax.xlane.f32.xlu0 %v822
    %v824 = vpop.xlane.xlu0 %823
    %v825 = vsub.f32 %v821, %v824
    %v826 = vmul.f32 %v825, 1.442695
    %v827 = vpow.pop %v826
    %v828 = vsel %vm318, %v827, 0.0
    %829 = vadd.xlane.f32.xlu0 %v828
    %v830 = vpop.xlane.xlu0 %829
    %v831 = vrcp.pop %v830
    %v832 = vmul.f32 %v827, %v831
    %834 = vrot.lane.b32.xlu0 %v156, 3
    %v835 = vpop.permute.xlu0 %834
    %836 = vrot.lane.b32.xlu0 %v231, 3
    %v837 = vpop.permute.xlu0 %836
    %vm838 = vcmask 23552
    %v839 = vsel %vm838, %v835, %v837
    %v842 = vsel %vm318, %v832, 0
    %844 = vmatprep.subr.mxu0 0.0
    %845 = vmatpush1.msra.mxu0 %v839
    %846 = vmatprep.subr.mxu0 0.0
    %847 = vmatpush1.msra.mxu0 0.0
    %848 = vmatprep.subr.mxu0 0.0
    %849 = vmatpush1.msra.mxu0 0.0
    %850 = vmatprep.subr.mxu0 0.0
    %851 = vmatpush1.msra.mxu0 0.0
    %852 = vmatprep.subr.mxu0 0.0
    %853 = vmatpush1.msra.mxu0 0.0
    %854 = vmatprep.subr.mxu0 0.0
    %855 = vmatpush1.msra.mxu0 0.0
    %856 = vmatprep.subr.mxu0 0.0
    %857 = vmatpush1.msra.mxu0 0.0
    %858 = vmatprep.subr.mxu0 0.0
    %859 = vmatpush1.msra.mxu0 0.0
    %860 = vmatprep.subr.mxu0 0.0
    %861 = vmatpush1.msra.mxu0 0.0
    %862 = vmatprep.subr.mxu0 0.0
    %863 = vmatpush1.msra.mxu0 0.0
    %864 = vmatprep.subr.mxu0 0.0
    %865 = vmatpush1.msra.mxu0 0.0
    %866 = vmatprep.subr.mxu0 0.0
    %867 = vmatpush1.msra.mxu0 0.0
    %868 = vmatprep.subr.mxu0 0.0
    %869 = vmatpush1.msra.mxu0 0.0
    %870 = vmatprep.subr.mxu0 0.0
    %871 = vmatpush1.msra.mxu0 0.0
    %872 = vmatprep.subr.mxu0 0.0
    %873 = vmatpush1.msra.mxu0 0.0
    %874 = vmatprep.subr.mxu0 0.0
    %875 = vmatpush1.msra.mxu0 0.0
    %876 = vmatprep.subr.mxu0 0.0
    %877 = vmatpush1.msra.mxu0 0.0
    %878 = vmatprep.subr.mxu0 0.0
    %879 = vmatpush1.msra.mxu0 0.0
    %880 = vmatprep.subr.mxu0 0.0
    %881 = vmatpush1.msra.mxu0 0.0
    %882 = vmatprep.subr.mxu0 0.0
    %883 = vmatpush1.msra.mxu0 0.0
    %884 = vmatprep.subr.mxu0 0.0
    %885 = vmatpush1.msra.mxu0 0.0
    %886 = vmatprep.subr.mxu0 0.0
    %887 = vmatpush1.msra.mxu0 0.0
    %888 = vmatprep.subr.mxu0 0.0
    %889 = vmatpush1.msra.mxu0 0.0
    %890 = vmatprep.subr.mxu0 0.0
    %891 = vmatpush1.msra.mxu0 0.0
    %892 = vmatprep.subr.mxu0 0.0
    %893 = vmatpush1.msra.mxu0 0.0
    %894 = vmatprep.subr.mxu0 0.0
    %895 = vmatpush1.msra.mxu0 0.0
    %896 = vmatprep.subr.mxu0 0.0
    %897 = vmatpush1.msra.mxu0 0.0
    %898 = vmatprep.subr.mxu0 0.0
    %899 = vmatpush1.msra.mxu0 0.0
    %900 = vmatprep.subr.mxu0 0.0
    %901 = vmatpush1.msra.mxu0 0.0
    %902 = vmatprep.subr.mxu0 0.0
    %903 = vmatpush1.msra.mxu0 0.0
    %904 = vmatprep.subr.mxu0 0.0
    %905 = vmatpush1.msra.mxu0 0.0
    %906 = vmatprep.subr.mxu0 0.0
    %907 = vmatpush1.msra.mxu0 0.0
    %908 = vmatprep.mubr.f32.mxu0 0.0
    %909 = vmatmul.mubr.f32.gmra.mrb[0].mxu0 %v842
    %v910 = vpop.f32.mrb[0].mxu0
    %v911 = vadd.f32 0.0, %v910
    %v912 = vpop.f32.mrb[0].mxu0
    %913 = vdwg.mxu0
    %915 = vrot.lane.b32.xlu0 %v574, 23
    %v916 = vpop.permute.xlu0 %915
    %919 = vrot.lane.b32.xlu0 %v740, 46
    %v920 = vpop.permute.xlu0 %919
    %923 = vrot.lane.b32.xlu0 %v911, 69
    %v924 = vpop.permute.xlu0 %923
    %v926 = vsel %vm242, %v404, %v916
    %vm927 = vcmask 375808
    %v928 = vsel %vm927, %v926, %v920
    %vm929 = vcmask 564224
    %v930 = vsel %vm929, %v928, %v924
    %931 = vst.msk [vmem:[#allocation2] sm:$0xff] %vm70, %v930
    %933 = vrot.lane.b32.xlu0 %v160, 36
    %v934 = vpop.permute.xlu0 %933
    %v935 = vsel %vm242, %v160, 0
    %v937 = vsel %vm242, %v934, 0
    %939 = vmatprep.subr.mxu0 0.0
    %940 = vmatpush1.xpose.msra.mxu0 %v937
    %941 = vmatprep.subr.mxu0 0.0
    %942 = vmatpush1.xpose.msra.mxu0 0.0
    %943 = vmatprep.subr.mxu0 0.0
    %944 = vmatpush1.xpose.msra.mxu0 0.0
    %945 = vmatprep.subr.mxu0 0.0
    %946 = vmatpush1.xpose.msra.mxu0 0.0
    %947 = vmatprep.subr.mxu0 0.0
    %948 = vmatpush1.xpose.msra.mxu0 0.0
    %949 = vmatprep.subr.mxu0 0.0
    %950 = vmatpush1.xpose.msra.mxu0 0.0
    %951 = vmatprep.subr.mxu0 0.0
    %952 = vmatpush1.xpose.msra.mxu0 0.0
    %953 = vmatprep.subr.mxu0 0.0
    %954 = vmatpush1.xpose.msra.mxu0 0.0
    %955 = vmatprep.subr.mxu0 0.0
    %956 = vmatpush1.xpose.msra.mxu0 0.0
    %957 = vmatprep.subr.mxu0 0.0
    %958 = vmatpush1.xpose.msra.mxu0 0.0
    %959 = vmatprep.subr.mxu0 0.0
    %960 = vmatpush1.xpose.msra.mxu0 0.0
    %961 = vmatprep.subr.mxu0 0.0
    %962 = vmatpush1.xpose.msra.mxu0 0.0
    %963 = vmatprep.subr.mxu0 0.0
    %964 = vmatpush1.xpose.msra.mxu0 0.0
    %965 = vmatprep.subr.mxu0 0.0
    %966 = vmatpush1.xpose.msra.mxu0 0.0
    %967 = vmatprep.subr.mxu0 0.0
    %968 = vmatpush1.xpose.msra.mxu0 0.0
    %969 = vmatprep.subr.mxu0 0.0
    %970 = vmatpush1.xpose.msra.mxu0 0.0
    %971 = vmatprep.subr.mxu0 0.0
    %972 = vmatpush1.xpose.msra.mxu0 0.0
    %973 = vmatprep.subr.mxu0 0.0
    %974 = vmatpush1.xpose.msra.mxu0 0.0
    %975 = vmatprep.subr.mxu0 0.0
    %976 = vmatpush1.xpose.msra.mxu0 0.0
    %977 = vmatprep.subr.mxu0 0.0
    %978 = vmatpush1.xpose.msra.mxu0 0.0
    %979 = vmatprep.subr.mxu0 0.0
    %980 = vmatpush1.xpose.msra.mxu0 0.0
    %981 = vmatprep.subr.mxu0 0.0
    %982 = vmatpush1.xpose.msra.mxu0 0.0
    %983 = vmatprep.subr.mxu0 0.0
    %984 = vmatpush1.xpose.msra.mxu0 0.0
    %985 = vmatprep.subr.mxu0 0.0
    %986 = vmatpush1.xpose.msra.mxu0 0.0
    %987 = vmatprep.subr.mxu0 0.0
    %988 = vmatpush1.xpose.msra.mxu0 0.0
    %989 = vmatprep.subr.mxu0 0.0
    %990 = vmatpush1.xpose.msra.mxu0 0.0
    %991 = vmatprep.subr.mxu0 0.0
    %992 = vmatpush1.xpose.msra.mxu0 0.0
    %993 = vmatprep.subr.mxu0 0.0
    %994 = vmatpush1.xpose.msra.mxu0 0.0
    %995 = vmatprep.subr.mxu0 0.0
    %996 = vmatpush1.xpose.msra.mxu0 0.0
    %997 = vmatprep.subr.mxu0 0.0
    %998 = vmatpush1.xpose.msra.mxu0 0.0
    %999 = vmatprep.subr.mxu0 0.0
    %1000 = vmatpush1.xpose.msra.mxu0 0.0
    %1001 = vmatprep.subr.mxu0 0.0
    %1002 = vmatpush1.xpose.msra.mxu0 0.0
    %1003 = vmatprep.mubr.f32.mxu0 0.0
    %1004 = vmatmul.mubr.f32.gmra.mrb[0].mxu0 %v935
    %v1005 = vpop.f32.mrb[0].mxu0
    %v1006 = vadd.f32 0.0, %v1005
    %v1007 = vpop.f32.mrb[0].mxu0
    %1008 = vdwg.mxu0
    %v1009 = vmul.f32 %v1006, 0.1042572
    %v1010 = vsel %vm318, %v1009, -inf
    %1011 = vmax.xlane.f32.xlu0 %v1010
    %v1012 = vpop.xlane.xlu0 %1011
    %v1013 = vsub.f32 %v1009, %v1012
    %v1014 = vmul.f32 %v1013, 1.442695
    %v1015 = vpow.pop %v1014
    %v1016 = vsel %vm318, %v1015, 0.0
    %1017 = vadd.xlane.f32.xlu0 %v1016
    %v1018 = vpop.xlane.xlu0 %1017
    %v1019 = vrcp.pop %v1018
    %v1020 = vmul.f32 %v1015, %v1019
    %1022 = vrot.lane.b32.xlu0 %v162, 72
    %v1023 = vpop.permute.xlu0 %1022
    %v1026 = vsel %vm318, %v1020, 0
    %1028 = vmatprep.subr.mxu0 0.0
    %1029 = vmatpush1.msra.mxu0 %v1023
    %1030 = vmatprep.subr.mxu0 0.0
    %1031 = vmatpush1.msra.mxu0 0.0
    %1032 = vmatprep.subr.mxu0 0.0
    %1033 = vmatpush1.msra.mxu0 0.0
    %1034 = vmatprep.subr.mxu0 0.0
    %1035 = vmatpush1.msra.mxu0 0.0
    %1036 = vmatprep.subr.mxu0 0.0
    %1037 = vmatpush1.msra.mxu0 0.0
    %1038 = vmatprep.subr.mxu0 0.0
    %1039 = vmatpush1.msra.mxu0 0.0
    %1040 = vmatprep.subr.mxu0 0.0
    %1041 = vmatpush1.msra.mxu0 0.0
    %1042 = vmatprep.subr.mxu0 0.0
    %1043 = vmatpush1.msra.mxu0 0.0
    %1044 = vmatprep.subr.mxu0 0.0
    %1045 = vmatpush1.msra.mxu0 0.0
    %1046 = vmatprep.subr.mxu0 0.0
    %1047 = vmatpush1.msra.mxu0 0.0
    %1048 = vmatprep.subr.mxu0 0.0
    %1049 = vmatpush1.msra.mxu0 0.0
    %1050 = vmatprep.subr.mxu0 0.0
    %1051 = vmatpush1.msra.mxu0 0.0
    %1052 = vmatprep.subr.mxu0 0.0
    %1053 = vmatpush1.msra.mxu0 0.0
    %1054 = vmatprep.subr.mxu0 0.0
    %1055 = vmatpush1.msra.mxu0 0.0
    %1056 = vmatprep.subr.mxu0 0.0
    %1057 = vmatpush1.msra.mxu0 0.0
    %1058 = vmatprep.subr.mxu0 0.0
    %1059 = vmatpush1.msra.mxu0 0.0
    %1060 = vmatprep.subr.mxu0 0.0
    %1061 = vmatpush1.msra.mxu0 0.0
    %1062 = vmatprep.subr.mxu0 0.0
    %1063 = vmatpush1.msra.mxu0 0.0
    %1064 = vmatprep.subr.mxu0 0.0
    %1065 = vmatpush1.msra.mxu0 0.0
    %1066 = vmatprep.subr.mxu0 0.0
    %1067 = vmatpush1.msra.mxu0 0.0
    %1068 = vmatprep.subr.mxu0 0.0
    %1069 = vmatpush1.msra.mxu0 0.0
    %1070 = vmatprep.subr.mxu0 0.0
    %1071 = vmatpush1.msra.mxu0 0.0
    %1072 = vmatprep.subr.mxu0 0.0
    %1073 = vmatpush1.msra.mxu0 0.0
    %1074 = vmatprep.subr.mxu0 0.0
    %1075 = vmatpush1.msra.mxu0 0.0
    %1076 = vmatprep.subr.mxu0 0.0
    %1077 = vmatpush1.msra.mxu0 0.0
    %1078 = vmatprep.subr.mxu0 0.0
    %1079 = vmatpush1.msra.mxu0 0.0
    %1080 = vmatprep.subr.mxu0 0.0
    %1081 = vmatpush1.msra.mxu0 0.0
    %1082 = vmatprep.subr.mxu0 0.0
    %1083 = vmatpush1.msra.mxu0 0.0
    %1084 = vmatprep.subr.mxu0 0.0
    %1085 = vmatpush1.msra.mxu0 0.0
    %1086 = vmatprep.subr.mxu0 0.0
    %1087 = vmatpush1.msra.mxu0 0.0
    %1088 = vmatprep.subr.mxu0 0.0
    %1089 = vmatpush1.msra.mxu0 0.0
    %1090 = vmatprep.subr.mxu0 0.0
    %1091 = vmatpush1.msra.mxu0 0.0
    %1092 = vmatprep.mubr.f32.mxu0 0.0
    %1093 = vmatmul.mubr.f32.gmra.mrb[0].mxu0 %v1026
    %v1094 = vpop.f32.mrb[0].mxu0
    %v1095 = vadd.f32 0.0, %v1094
    %v1096 = vpop.f32.mrb[0].mxu0
    %1097 = vdwg.mxu0
    %1098 = vrot.lane.b32.xlu0 %v160, 105
    %v1099 = vpop.permute.xlu0 %1098
    %1100 = vrot.lane.b32.xlu0 %v160, 13
    %v1101 = vpop.permute.xlu0 %1100
    %1102 = vrot.lane.b32.xlu0 %v162, 13
    %v1103 = vpop.permute.xlu0 %1102
    %v1104 = vsel %vm413, %v1101, %v1103
    %v1105 = vsel %vm242, %v1099, 0
    %v1107 = vsel %vm242, %v1104, 0
    %1109 = vmatprep.subr.mxu0 0.0
    %1110 = vmatpush1.xpose.msra.mxu0 %v1107
    %1111 = vmatprep.subr.mxu0 0.0
    %1112 = vmatpush1.xpose.msra.mxu0 0.0
    %1113 = vmatprep.subr.mxu0 0.0
    %1114 = vmatpush1.xpose.msra.mxu0 0.0
    %1115 = vmatprep.subr.mxu0 0.0
    %1116 = vmatpush1.xpose.msra.mxu0 0.0
    %1117 = vmatprep.subr.mxu0 0.0
    %1118 = vmatpush1.xpose.msra.mxu0 0.0
    %1119 = vmatprep.subr.mxu0 0.0
    %1120 = vmatpush1.xpose.msra.mxu0 0.0
    %1121 = vmatprep.subr.mxu0 0.0
    %1122 = vmatpush1.xpose.msra.mxu0 0.0
    %1123 = vmatprep.subr.mxu0 0.0
    %1124 = vmatpush1.xpose.msra.mxu0 0.0
    %1125 = vmatprep.subr.mxu0 0.0
    %1126 = vmatpush1.xpose.msra.mxu0 0.0
    %1127 = vmatprep.subr.mxu0 0.0
    %1128 = vmatpush1.xpose.msra.mxu0 0.0
    %1129 = vmatprep.subr.mxu0 0.0
    %1130 = vmatpush1.xpose.msra.mxu0 0.0
    %1131 = vmatprep.subr.mxu0 0.0
    %1132 = vmatpush1.xpose.msra.mxu0 0.0
    %1133 = vmatprep.subr.mxu0 0.0
    %1134 = vmatpush1.xpose.msra.mxu0 0.0
    %1135 = vmatprep.subr.mxu0 0.0
    %1136 = vmatpush1.xpose.msra.mxu0 0.0
    %1137 = vmatprep.subr.mxu0 0.0
    %1138 = vmatpush1.xpose.msra.mxu0 0.0
    %1139 = vmatprep.subr.mxu0 0.0
    %1140 = vmatpush1.xpose.msra.mxu0 0.0
    %1141 = vmatprep.subr.mxu0 0.0
    %1142 = vmatpush1.xpose.msra.mxu0 0.0
    %1143 = vmatprep.subr.mxu0 0.0
    %1144 = vmatpush1.xpose.msra.mxu0 0.0
    %1145 = vmatprep.subr.mxu0 0.0
    %1146 = vmatpush1.xpose.msra.mxu0 0.0
    %1147 = vmatprep.subr.mxu0 0.0
    %1148 = vmatpush1.xpose.msra.mxu0 0.0
    %1149 = vmatprep.subr.mxu0 0.0
    %1150 = vmatpush1.xpose.msra.mxu0 0.0
    %1151 = vmatprep.subr.mxu0 0.0
    %1152 = vmatpush1.xpose.msra.mxu0 0.0
    %1153 = vmatprep.subr.mxu0 0.0
    %1154 = vmatpush1.xpose.msra.mxu0 0.0
    %1155 = vmatprep.subr.mxu0 0.0
    %1156 = vmatpush1.xpose.msra.mxu0 0.0
    %1157 = vmatprep.subr.mxu0 0.0
    %1158 = vmatpush1.xpose.msra.mxu0 0.0
    %1159 = vmatprep.subr.mxu0 0.0
    %1160 = vmatpush1.xpose.msra.mxu0 0.0
    %1161 = vmatprep.subr.mxu0 0.0
    %1162 = vmatpush1.xpose.msra.mxu0 0.0
    %1163 = vmatprep.subr.mxu0 0.0
    %1164 = vmatpush1.xpose.msra.mxu0 0.0
    %1165 = vmatprep.subr.mxu0 0.0
    %1166 = vmatpush1.xpose.msra.mxu0 0.0
    %1167 = vmatprep.subr.mxu0 0.0
    %1168 = vmatpush1.xpose.msra.mxu0 0.0
    %1169 = vmatprep.subr.mxu0 0.0
    %1170 = vmatpush1.xpose.msra.mxu0 0.0
    %1171 = vmatprep.subr.mxu0 0.0
    %1172 = vmatpush1.xpose.msra.mxu0 0.0
    %1173 = vmatprep.mubr.f32.mxu0 0.0
    %1174 = vmatmul.mubr.f32.gmra.mrb[0].mxu0 %v1105
    %v1175 = vpop.f32.mrb[0].mxu0
    %v1176 = vadd.f32 0.0, %v1175
    %v1177 = vpop.f32.mrb[0].mxu0
    %1178 = vdwg.mxu0
    %v1179 = vmul.f32 %v1176, 0.1042572
    %v1180 = vsel %vm318, %v1179, -inf
    %1181 = vmax.xlane.f32.xlu0 %v1180
    %v1182 = vpop.xlane.xlu0 %1181
    %v1183 = vsub.f32 %v1179, %v1182
    %v1184 = vmul.f32 %v1183, 1.442695
    %v1185 = vpow.pop %v1184
    %v1186 = vsel %vm318, %v1185, 0.0
    %1187 = vadd.xlane.f32.xlu0 %v1186
    %v1188 = vpop.xlane.xlu0 %1187
    %v1189 = vrcp.pop %v1188
    %v1190 = vmul.f32 %v1185, %v1189
    %1191 = vrot.lane.b32.xlu0 %v162, 49
    %v1192 = vpop.permute.xlu0 %1191
    %v1195 = vsel %vm318, %v1190, 0
    %1197 = vmatprep.subr.mxu0 0.0
    %1198 = vmatpush1.msra.mxu0 %v1192
    %1199 = vmatprep.subr.mxu0 0.0
    %1200 = vmatpush1.msra.mxu0 0.0
    %1201 = vmatprep.subr.mxu0 0.0
    %1202 = vmatpush1.msra.mxu0 0.0
    %1203 = vmatprep.subr.mxu0 0.0
    %1204 = vmatpush1.msra.mxu0 0.0
    %1205 = vmatprep.subr.mxu0 0.0
    %1206 = vmatpush1.msra.mxu0 0.0
    %1207 = vmatprep.subr.mxu0 0.0
    %1208 = vmatpush1.msra.mxu0 0.0
    %1209 = vmatprep.subr.mxu0 0.0
    %1210 = vmatpush1.msra.mxu0 0.0
    %1211 = vmatprep.subr.mxu0 0.0
    %1212 = vmatpush1.msra.mxu0 0.0
    %1213 = vmatprep.subr.mxu0 0.0
    %1214 = vmatpush1.msra.mxu0 0.0
    %1215 = vmatprep.subr.mxu0 0.0
    %1216 = vmatpush1.msra.mxu0 0.0
    %1217 = vmatprep.subr.mxu0 0.0
    %1218 = vmatpush1.msra.mxu0 0.0
    %1219 = vmatprep.subr.mxu0 0.0
    %1220 = vmatpush1.msra.mxu0 0.0
    %1221 = vmatprep.subr.mxu0 0.0
    %1222 = vmatpush1.msra.mxu0 0.0
    %1223 = vmatprep.subr.mxu0 0.0
    %1224 = vmatpush1.msra.mxu0 0.0
    %1225 = vmatprep.subr.mxu0 0.0
    %1226 = vmatpush1.msra.mxu0 0.0
    %1227 = vmatprep.subr.mxu0 0.0
    %1228 = vmatpush1.msra.mxu0 0.0
    %1229 = vmatprep.subr.mxu0 0.0
    %1230 = vmatpush1.msra.mxu0 0.0
    %1231 = vmatprep.subr.mxu0 0.0
    %1232 = vmatpush1.msra.mxu0 0.0
    %1233 = vmatprep.subr.mxu0 0.0
    %1234 = vmatpush1.msra.mxu0 0.0
    %1235 = vmatprep.subr.mxu0 0.0
    %1236 = vmatpush1.msra.mxu0 0.0
    %1237 = vmatprep.subr.mxu0 0.0
    %1238 = vmatpush1.msra.mxu0 0.0
    %1239 = vmatprep.subr.mxu0 0.0
    %1240 = vmatpush1.msra.mxu0 0.0
    %1241 = vmatprep.subr.mxu0 0.0
    %1242 = vmatpush1.msra.mxu0 0.0
    %1243 = vmatprep.subr.mxu0 0.0
    %1244 = vmatpush1.msra.mxu0 0.0
    %1245 = vmatprep.subr.mxu0 0.0
    %1246 = vmatpush1.msra.mxu0 0.0
    %1247 = vmatprep.subr.mxu0 0.0
    %1248 = vmatpush1.msra.mxu0 0.0
    %1249 = vmatprep.subr.mxu0 0.0
    %1250 = vmatpush1.msra.mxu0 0.0
    %1251 = vmatprep.subr.mxu0 0.0
    %1252 = vmatpush1.msra.mxu0 0.0
    %1253 = vmatprep.subr.mxu0 0.0
    %1254 = vmatpush1.msra.mxu0 0.0
    %1255 = vmatprep.subr.mxu0 0.0
    %1256 = vmatpush1.msra.mxu0 0.0
    %1257 = vmatprep.subr.mxu0 0.0
    %1258 = vmatpush1.msra.mxu0 0.0
    %1259 = vmatprep.subr.mxu0 0.0
    %1260 = vmatpush1.msra.mxu0 0.0
    %1261 = vmatprep.mubr.f32.mxu0 0.0
    %1262 = vmatmul.mubr.f32.gmra.mrb[0].mxu0 %v1195
    %v1263 = vpop.f32.mrb[0].mxu0
    %v1264 = vadd.f32 0.0, %v1263
    %v1265 = vpop.f32.mrb[0].mxu0
    %1266 = vdwg.mxu0
    %1267 = vrot.lane.b32.xlu0 %v160, 82
    %v1268 = vpop.permute.xlu0 %1267
    %1269 = vrot.lane.b32.xlu0 %v162, 118
    %v1270 = vpop.permute.xlu0 %1269
    %v1271 = vsel %vm242, %v1268, 0
    %v1273 = vsel %vm242, %v1270, 0
    %1275 = vmatprep.subr.mxu0 0.0
    %1276 = vmatpush1.xpose.msra.mxu0 %v1273
    %1277 = vmatprep.subr.mxu0 0.0
    %1278 = vmatpush1.xpose.msra.mxu0 0.0
    %1279 = vmatprep.subr.mxu0 0.0
    %1280 = vmatpush1.xpose.msra.mxu0 0.0
    %1281 = vmatprep.subr.mxu0 0.0
    %1282 = vmatpush1.xpose.msra.mxu0 0.0
    %1283 = vmatprep.subr.mxu0 0.0
    %1284 = vmatpush1.xpose.msra.mxu0 0.0
    %1285 = vmatprep.subr.mxu0 0.0
    %1286 = vmatpush1.xpose.msra.mxu0 0.0
    %1287 = vmatprep.subr.mxu0 0.0
    %1288 = vmatpush1.xpose.msra.mxu0 0.0
    %1289 = vmatprep.subr.mxu0 0.0
    %1290 = vmatpush1.xpose.msra.mxu0 0.0
    %1291 = vmatprep.subr.mxu0 0.0
    %1292 = vmatpush1.xpose.msra.mxu0 0.0
    %1293 = vmatprep.subr.mxu0 0.0
    %1294 = vmatpush1.xpose.msra.mxu0 0.0
    %1295 = vmatprep.subr.mxu0 0.0
    %1296 = vmatpush1.xpose.msra.mxu0 0.0
    %1297 = vmatprep.subr.mxu0 0.0
    %1298 = vmatpush1.xpose.msra.mxu0 0.0
    %1299 = vmatprep.subr.mxu0 0.0
    %1300 = vmatpush1.xpose.msra.mxu0 0.0
    %1301 = vmatprep.subr.mxu0 0.0
    %1302 = vmatpush1.xpose.msra.mxu0 0.0
    %1303 = vmatprep.subr.mxu0 0.0
    %1304 = vmatpush1.xpose.msra.mxu0 0.0
    %1305 = vmatprep.subr.mxu0 0.0
    %1306 = vmatpush1.xpose.msra.mxu0 0.0
    %1307 = vmatprep.subr.mxu0 0.0
    %1308 = vmatpush1.xpose.msra.mxu0 0.0
    %1309 = vmatprep.subr.mxu0 0.0
    %1310 = vmatpush1.xpose.msra.mxu0 0.0
    %1311 = vmatprep.subr.mxu0 0.0
    %1312 = vmatpush1.xpose.msra.mxu0 0.0
    %1313 = vmatprep.subr.mxu0 0.0
    %1314 = vmatpush1.xpose.msra.mxu0 0.0
    %1315 = vmatprep.subr.mxu0 0.0
    %1316 = vmatpush1.xpose.msra.mxu0 0.0
    %1317 = vmatprep.subr.mxu0 0.0
    %1318 = vmatpush1.xpose.msra.mxu0 0.0
    %1319 = vmatprep.subr.mxu0 0.0
    %1320 = vmatpush1.xpose.msra.mxu0 0.0
    %1321 = vmatprep.subr.mxu0 0.0
    %1322 = vmatpush1.xpose.msra.mxu0 0.0
    %1323 = vmatprep.subr.mxu0 0.0
    %1324 = vmatpush1.xpose.msra.mxu0 0.0
    %1325 = vmatprep.subr.mxu0 0.0
    %1326 = vmatpush1.xpose.msra.mxu0 0.0
    %1327 = vmatprep.subr.mxu0 0.0
    %1328 = vmatpush1.xpose.msra.mxu0 0.0
    %1329 = vmatprep.subr.mxu0 0.0
    %1330 = vmatpush1.xpose.msra.mxu0 0.0
    %1331 = vmatprep.subr.mxu0 0.0
    %1332 = vmatpush1.xpose.msra.mxu0 0.0
    %1333 = vmatprep.subr.mxu0 0.0
    %1334 = vmatpush1.xpose.msra.mxu0 0.0
    %1335 = vmatprep.subr.mxu0 0.0
    %1336 = vmatpush1.xpose.msra.mxu0 0.0
    %1337 = vmatprep.subr.mxu0 0.0
    %1338 = vmatpush1.xpose.msra.mxu0 0.0
    %1339 = vmatprep.mubr.f32.mxu0 0.0
    %1340 = vmatmul.mubr.f32.gmra.mrb[0].mxu0 %v1271
    %v1341 = vpop.f32.mrb[0].mxu0
    %v1342 = vadd.f32 0.0, %v1341
    %v1343 = vpop.f32.mrb[0].mxu0
    %1344 = vdwg.mxu0
    %v1345 = vmul.f32 %v1342, 0.1042572
    %v1346 = vsel %vm318, %v1345, -inf
    %1347 = vmax.xlane.f32.xlu0 %v1346
    %v1348 = vpop.xlane.xlu0 %1347
    %v1349 = vsub.f32 %v1345, %v1348
    %v1350 = vmul.f32 %v1349, 1.442695
    %v1351 = vpow.pop %v1350
    %v1352 = vsel %vm318, %v1351, 0.0
    %1353 = vadd.xlane.f32.xlu0 %v1352
    %v1354 = vpop.xlane.xlu0 %1353
    %v1355 = vrcp.pop %v1354
    %v1356 = vmul.f32 %v1351, %v1355
    %1357 = vrot.lane.b32.xlu0 %v162, 26
    %v1358 = vpop.permute.xlu0 %1357
    %v1361 = vsel %vm318, %v1356, 0
    %1363 = vmatprep.subr.mxu0 0.0
    %1364 = vmatpush1.msra.mxu0 %v1358
    %1365 = vmatprep.subr.mxu0 0.0
    %1366 = vmatpush1.msra.mxu0 0.0
    %1367 = vmatprep.subr.mxu0 0.0
    %1368 = vmatpush1.msra.mxu0 0.0
    %1369 = vmatprep.subr.mxu0 0.0
    %1370 = vmatpush1.msra.mxu0 0.0
    %1371 = vmatprep.subr.mxu0 0.0
    %1372 = vmatpush1.msra.mxu0 0.0
    %1373 = vmatprep.subr.mxu0 0.0
    %1374 = vmatpush1.msra.mxu0 0.0
    %1375 = vmatprep.subr.mxu0 0.0
    %1376 = vmatpush1.msra.mxu0 0.0
    %1377 = vmatprep.subr.mxu0 0.0
    %1378 = vmatpush1.msra.mxu0 0.0
    %1379 = vmatprep.subr.mxu0 0.0
    %1380 = vmatpush1.msra.mxu0 0.0
    %1381 = vmatprep.subr.mxu0 0.0
    %1382 = vmatpush1.msra.mxu0 0.0
    %1383 = vmatprep.subr.mxu0 0.0
    %1384 = vmatpush1.msra.mxu0 0.0
    %1385 = vmatprep.subr.mxu0 0.0
    %1386 = vmatpush1.msra.mxu0 0.0
    %1387 = vmatprep.subr.mxu0 0.0
    %1388 = vmatpush1.msra.mxu0 0.0
    %1389 = vmatprep.subr.mxu0 0.0
    %1390 = vmatpush1.msra.mxu0 0.0
    %1391 = vmatprep.subr.mxu0 0.0
    %1392 = vmatpush1.msra.mxu0 0.0
    %1393 = vmatprep.subr.mxu0 0.0
    %1394 = vmatpush1.msra.mxu0 0.0
    %1395 = vmatprep.subr.mxu0 0.0
    %1396 = vmatpush1.msra.mxu0 0.0
    %1397 = vmatprep.subr.mxu0 0.0
    %1398 = vmatpush1.msra.mxu0 0.0
    %1399 = vmatprep.subr.mxu0 0.0
    %1400 = vmatpush1.msra.mxu0 0.0
    %1401 = vmatprep.subr.mxu0 0.0
    %1402 = vmatpush1.msra.mxu0 0.0
    %1403 = vmatprep.subr.mxu0 0.0
    %1404 = vmatpush1.msra.mxu0 0.0
    %1405 = vmatprep.subr.mxu0 0.0
    %1406 = vmatpush1.msra.mxu0 0.0
    %1407 = vmatprep.subr.mxu0 0.0
    %1408 = vmatpush1.msra.mxu0 0.0
    %1409 = vmatprep.subr.mxu0 0.0
    %1410 = vmatpush1.msra.mxu0 0.0
    %1411 = vmatprep.subr.mxu0 0.0
    %1412 = vmatpush1.msra.mxu0 0.0
    %1413 = vmatprep.subr.mxu0 0.0
    %1414 = vmatpush1.msra.mxu0 0.0
    %1415 = vmatprep.subr.mxu0 0.0
    %1416 = vmatpush1.msra.mxu0 0.0
    %1417 = vmatprep.subr.mxu0 0.0
    %1418 = vmatpush1.msra.mxu0 0.0
    %1419 = vmatprep.subr.mxu0 0.0
    %1420 = vmatpush1.msra.mxu0 0.0
    %1421 = vmatprep.subr.mxu0 0.0
    %1422 = vmatpush1.msra.mxu0 0.0
    %1423 = vmatprep.subr.mxu0 0.0
    %1424 = vmatpush1.msra.mxu0 0.0
    %1425 = vmatprep.subr.mxu0 0.0
    %1426 = vmatpush1.msra.mxu0 0.0
    %1427 = vmatprep.mubr.f32.mxu0 0.0
    %1428 = vmatmul.mubr.f32.gmra.mrb[0].mxu0 %v1361
    %v1429 = vpop.f32.mrb[0].mxu0
    %v1430 = vadd.f32 0.0, %v1429
    %v1431 = vpop.f32.mrb[0].mxu0
    %1432 = vdwg.mxu0
    %1433 = vrot.lane.b32.xlu0 %v160, 59
    %v1434 = vpop.permute.xlu0 %1433
    %1435 = vrot.lane.b32.xlu0 %v162, 95
    %v1436 = vpop.permute.xlu0 %1435
    %v1437 = vsel %vm242, %v1434, 0
    %v1439 = vsel %vm242, %v1436, 0
    %1441 = vmatprep.subr.mxu0 0.0
    %1442 = vmatpush1.xpose.msra.mxu0 %v1439
    %1443 = vmatprep.subr.mxu0 0.0
    %1444 = vmatpush1.xpose.msra.mxu0 0.0
    %1445 = vmatprep.subr.mxu0 0.0
    %1446 = vmatpush1.xpose.msra.mxu0 0.0
    %1447 = vmatprep.subr.mxu0 0.0
    %1448 = vmatpush1.xpose.msra.mxu0 0.0
    %1449 = vmatprep.subr.mxu0 0.0
    %1450 = vmatpush1.xpose.msra.mxu0 0.0
    %1451 = vmatprep.subr.mxu0 0.0
    %1452 = vmatpush1.xpose.msra.mxu0 0.0
    %1453 = vmatprep.subr.mxu0 0.0
    %1454 = vmatpush1.xpose.msra.mxu0 0.0
    %1455 = vmatprep.subr.mxu0 0.0
    %1456 = vmatpush1.xpose.msra.mxu0 0.0
    %1457 = vmatprep.subr.mxu0 0.0
    %1458 = vmatpush1.xpose.msra.mxu0 0.0
    %1459 = vmatprep.subr.mxu0 0.0
    %1460 = vmatpush1.xpose.msra.mxu0 0.0
    %1461 = vmatprep.subr.mxu0 0.0
    %1462 = vmatpush1.xpose.msra.mxu0 0.0
    %1463 = vmatprep.subr.mxu0 0.0
    %1464 = vmatpush1.xpose.msra.mxu0 0.0
    %1465 = vmatprep.subr.mxu0 0.0
    %1466 = vmatpush1.xpose.msra.mxu0 0.0
    %1467 = vmatprep.subr.mxu0 0.0
    %1468 = vmatpush1.xpose.msra.mxu0 0.0
    %1469 = vmatprep.subr.mxu0 0.0
    %1470 = vmatpush1.xpose.msra.mxu0 0.0
    %1471 = vmatprep.subr.mxu0 0.0
    %1472 = vmatpush1.xpose.msra.mxu0 0.0
    %1473 = vmatprep.subr.mxu0 0.0
    %1474 = vmatpush1.xpose.msra.mxu0 0.0
    %1475 = vmatprep.subr.mxu0 0.0
    %1476 = vmatpush1.xpose.msra.mxu0 0.0
    %1477 = vmatprep.subr.mxu0 0.0
    %1478 = vmatpush1.xpose.msra.mxu0 0.0
    %1479 = vmatprep.subr.mxu0 0.0
    %1480 = vmatpush1.xpose.msra.mxu0 0.0
    %1481 = vmatprep.subr.mxu0 0.0
    %1482 = vmatpush1.xpose.msra.mxu0 0.0
    %1483 = vmatprep.subr.mxu0 0.0
    %1484 = vmatpush1.xpose.msra.mxu0 0.0
    %1485 = vmatprep.subr.mxu0 0.0
    %1486 = vmatpush1.xpose.msra.mxu0 0.0
    %1487 = vmatprep.subr.mxu0 0.0
    %1488 = vmatpush1.xpose.msra.mxu0 0.0
    %1489 = vmatprep.subr.mxu0 0.0
    %1490 = vmatpush1.xpose.msra.mxu0 0.0
    %1491 = vmatprep.subr.mxu0 0.0
    %1492 = vmatpush1.xpose.msra.mxu0 0.0
    %1493 = vmatprep.subr.mxu0 0.0
    %1494 = vmatpush1.xpose.msra.mxu0 0.0
    %1495 = vmatprep.subr.mxu0 0.0
    %1496 = vmatpush1.xpose.msra.mxu0 0.0
    %1497 = vmatprep.subr.mxu0 0.0
    %1498 = vmatpush1.xpose.msra.mxu0 0.0
    %1499 = vmatprep.subr.mxu0 0.0
    %1500 = vmatpush1.xpose.msra.mxu0 0.0
    %1501 = vmatprep.subr.mxu0 0.0
    %1502 = vmatpush1.xpose.msra.mxu0 0.0
    %1503 = vmatprep.subr.mxu0 0.0
    %1504 = vmatpush1.xpose.msra.mxu0 0.0
    %1505 = vmatprep.mubr.f32.mxu0 0.0
    %1506 = vmatmul.mubr.f32.gmra.mrb[0].mxu0 %v1437
    %v1507 = vpop.f32.mrb[0].mxu0
    %v1508 = vadd.f32 0.0, %v1507
    %v1509 = vpop.f32.mrb[0].mxu0
    %1510 = vdwg.mxu0
    %v1511 = vmul.f32 %v1508, 0.1042572
    %v1512 = vsel %vm318, %v1511, -inf
    %1513 = vmax.xlane.f32.xlu0 %v1512
    %v1514 = vpop.xlane.xlu0 %1513
    %v1515 = vsub.f32 %v1511, %v1514
    %v1516 = vmul.f32 %v1515, 1.442695
    %v1517 = vpow.pop %v1516
    %v1518 = vsel %vm318, %v1517, 0.0
    %1519 = vadd.xlane.f32.xlu0 %v1518
    %v1520 = vpop.xlane.xlu0 %1519
    %v1521 = vrcp.pop %v1520
    %v1522 = vmul.f32 %v1517, %v1521
    %1524 = vrot.lane.b32.xlu0 %v162, 3
    %v1525 = vpop.permute.xlu0 %1524
    %1526 = vrot.lane.b32.xlu0 %v236, 3
    %v1527 = vpop.permute.xlu0 %1526
    %v1528 = vsel %vm838, %v1525, %v1527
    %v1531 = vsel %vm318, %v1522, 0
    %1533 = vmatprep.subr.mxu0 0.0
    %1534 = vmatpush1.msra.mxu0 %v1528
    %1535 = vmatprep.subr.mxu0 0.0
    %1536 = vmatpush1.msra.mxu0 0.0
    %1537 = vmatprep.subr.mxu0 0.0
    %1538 = vmatpush1.msra.mxu0 0.0
    %1539 = vmatprep.subr.mxu0 0.0
    %1540 = vmatpush1.msra.mxu0 0.0
    %1541 = vmatprep.subr.mxu0 0.0
    %1542 = vmatpush1.msra.mxu0 0.0
    %1543 = vmatprep.subr.mxu0 0.0
    %1544 = vmatpush1.msra.mxu0 0.0
    %1545 = vmatprep.subr.mxu0 0.0
    %1546 = vmatpush1.msra.mxu0 0.0
    %1547 = vmatprep.subr.mxu0 0.0
    %1548 = vmatpush1.msra.mxu0 0.0
    %1549 = vmatprep.subr.mxu0 0.0
    %1550 = vmatpush1.msra.mxu0 0.0
    %1551 = vmatprep.subr.mxu0 0.0
    %1552 = vmatpush1.msra.mxu0 0.0
    %1553 = vmatprep.subr.mxu0 0.0
    %1554 = vmatpush1.msra.mxu0 0.0
    %1555 = vmatprep.subr.mxu0 0.0
    %1556 = vmatpush1.msra.mxu0 0.0
    %1557 = vmatprep.subr.mxu0 0.0
    %1558 = vmatpush1.msra.mxu0 0.0
    %1559 = vmatprep.subr.mxu0 0.0
    %1560 = vmatpush1.msra.mxu0 0.0
    %1561 = vmatprep.subr.mxu0 0.0
    %1562 = vmatpush1.msra.mxu0 0.0
    %1563 = vmatprep.subr.mxu0 0.0
    %1564 = vmatpush1.msra.mxu0 0.0
    %1565 = vmatprep.subr.mxu0 0.0
    %1566 = vmatpush1.msra.mxu0 0.0
    %1567 = vmatprep.subr.mxu0 0.0
    %1568 = vmatpush1.msra.mxu0 0.0
    %1569 = vmatprep.subr.mxu0 0.0
    %1570 = vmatpush1.msra.mxu0 0.0
    %1571 = vmatprep.subr.mxu0 0.0
    %1572 = vmatpush1.msra.mxu0 0.0
    %1573 = vmatprep.subr.mxu0 0.0
    %1574 = vmatpush1.msra.mxu0 0.0
    %1575 = vmatprep.subr.mxu0 0.0
    %1576 = vmatpush1.msra.mxu0 0.0
    %1577 = vmatprep.subr.mxu0 0.0
    %1578 = vmatpush1.msra.mxu0 0.0
    %1579 = vmatprep.subr.mxu0 0.0
    %1580 = vmatpush1.msra.mxu0 0.0
    %1581 = vmatprep.subr.mxu0 0.0
    %1582 = vmatpush1.msra.mxu0 0.0
    %1583 = vmatprep.subr.mxu0 0.0
    %1584 = vmatpush1.msra.mxu0 0.0
    %1585 = vmatprep.subr.mxu0 0.0
    %1586 = vmatpush1.msra.mxu0 0.0
    %1587 = vmatprep.subr.mxu0 0.0
    %1588 = vmatpush1.msra.mxu0 0.0
    %1589 = vmatprep.subr.mxu0 0.0
    %1590 = vmatpush1.msra.mxu0 0.0
    %1591 = vmatprep.subr.mxu0 0.0
    %1592 = vmatpush1.msra.mxu0 0.0
    %1593 = vmatprep.subr.mxu0 0.0
    %1594 = vmatpush1.msra.mxu0 0.0
    %1595 = vmatprep.subr.mxu0 0.0
    %1596 = vmatpush1.msra.mxu0 0.0
    %1597 = vmatprep.mubr.f32.mxu0 0.0
    %1598 = vmatmul.mubr.f32.gmra.mrb[0].mxu0 %v1531
    %v1599 = vpop.f32.mrb[0].mxu0
    %v1600 = vadd.f32 0.0, %v1599
    %v1601 = vpop.f32.mrb[0].mxu0
    %1602 = vdwg.mxu0
    %1604 = vrot.lane.b32.xlu0 %v1264, 23
    %v1605 = vpop.permute.xlu0 %1604
    %1608 = vrot.lane.b32.xlu0 %v1430, 46
    %v1609 = vpop.permute.xlu0 %1608
    %1612 = vrot.lane.b32.xlu0 %v1600, 69
    %v1613 = vpop.permute.xlu0 %1612
    %v1615 = vsel %vm242, %v1095, %v1605
    %v1616 = vsel %vm927, %v1615, %v1609
    %v1617 = vsel %vm929, %v1616, %v1613
    %1618 = vst.msk [vmem:[#allocation2 + $0x8] sm:$0xff] %vm70, %v1617
    // Predicated region
    $region14: #{tpu_custom_call.1} parent=1 // pred_check
      _
    $region15: #{tpu_custom_call.1} parent=1 // pred_check_branch
      %1620 = sbr.rel (0) target = $region17
    $region16: #{tpu_custom_call.1} parent=1 // pred_region
      %s1622 = ssub.s32 256, 256
      %1623 = vsyncadd [#allocation3], %s1622
      %s1624 = sshll.u32 [#allocation2], 4
      %s1625 = int_to_ptr.vmem [resolvable:$true] %s1624
      %1630 = dma.vmem_to_hbm [thread:$0]  %s1625, 256, %s3, [#allocation3], 128, 128, 8
    $region17: #{tpu_custom_call.1} parent=1 // pred_fallthru
      _
    // Predicated region
    $region18: #{tpu_custom_call.1} parent=1 // pred_check
      _
    $region19: #{tpu_custom_call.1} parent=1 // pred_check_branch
      %1632 = sbr.rel (0) target = $region21
    $region20: #{tpu_custom_call.1} parent=1 // pred_region
      %1633 = dma.done [#allocation3], 256
    $region21: #{tpu_custom_call.1} parent=1 // pred_fallthru
      _
    %1634 = vsyncpa [#allocation3], 1

</llo_original>
